<compile_context>
chip_gen: v6e
topology: v6e:2x2x1
jax: 0.10.0
libtpu: 0.0.40
codegen_flags: <defaults>
</compile_context>

<pallas_src>
from functools import partial

import jax
import jax.numpy as jnp
from jax.experimental import pallas as pl
from jax.experimental.pallas import tpu as pltpu


LEAKY_SLOPE = 0.01  # torch.nn.LeakyReLU default
DIMS = [12, 80, 80, 40, 20, 1]
# Column permutation used to build cpx; it MUST be an involution for the
# weight fold (W1b = -W1[:, PERM]) to be exact.
PERM = (3, 4, 5, 0, 1, 2, 6, 7, 8, 9, 10, 11)
assert tuple(PERM[PERM[i]] for i in range(12)) == tuple(range(12)), \
    "PERM must be an involution"


def _round_up(a, b):
    return (a + b - 1) // b * b


def _leaky_relu(h):
    # max(h, slope*h) == LeakyReLU(h) for slope < 1.
    return jnp.maximum(h, LEAKY_SLOPE * h)


def _dot(w, h):
    return jnp.dot(w, h, preferred_element_type=jnp.float32)


# --------------------------------------------------------------------------
# Kernels
# --------------------------------------------------------------------------
def _kernel_blockdiag(xt_ref, w1_ref, b1_ref, w2_ref, b2_ref,
                      w3_ref, b3_ref, w4_ref, b4_ref, w5c_ref, o_ref):
    """Both branches stacked on the feature (sublane) axis via block-diagonal
    weights.  Layers 1-4 stream only block_m lane-columns through the MXU and
    the final layer (plus the branch subtraction) runs on the VPU/XLU.

    xt_ref : (12, bm)      transposed input tile
    w1_ref : (160, 12)     [W1; -W1[:, PERM]]
    w2_ref : (160, 160)    block_diag(W2, W2)
    w3_ref : (80, 160)     block_diag(W3, W3)
    w4_ref : (40, 80)      block_diag(W4, W4)
    w5c_ref: (40, 1)       [w5, -w5]^T  (folds the final branch subtraction)
    bK_ref : (rows, 1)     duplicated biases as columns
    o_ref  : (1, bm)       lane-dense output tile
    """
    xt = xt_ref[...]
    h = _leaky_relu(_dot(w1_ref[...], xt) + b1_ref[...])       # (160, bm)
    h = _leaky_relu(_dot(w2_ref[...], h) + b2_ref[...])        # (160, bm)
    h = _leaky_relu(_dot(w3_ref[...], h) + b3_ref[...])        # (80,  bm)
    h = _leaky_relu(_dot(w4_ref[...], h) + b4_ref[...])        # (40,  bm)
    # 1-output-row layer on VPU+XLU; b5 cancels in MLP(x) - MLP(cpx).
    o_ref[...] = jnp.sum(w5c_ref[...] * h, axis=0, keepdims=True)


def _kernel_lanestack(xt_ref, w1_ref, b1_ref, w2_ref, b2_ref,
                      w3_ref, b3_ref, w4_ref, b4_ref, w5c_ref,
                      o_ref, h_scratch):
    """Variant for 128x128-MXU chips (v5e and older): both branches stacked on
    the batch/lane axis so every stationary weight stays a single MXU tile.

    xt_ref   : (12, bm)
    w1_ref   : (160, 12)   fused [W1; -W1[:, PERM]]
    w2..w4   : torch-layout (out, in) weights
    w5c_ref  : (20, 1)     w5 as a column
    o_ref    : (1, bm)
    h_scratch: (80, 2*bm)  VMEM scratch holding both branches side by side
    """
    bm = o_ref.shape[1]
    xt = xt_ref[...]
    h1 = _leaky_relu(_dot(w1_ref[...], xt) + b1_ref[...])      # (160, bm)
    # Split branches at aligned lane offsets 0 / bm (both multiples of 128):
    # unmasked stores, no concatenate copy.
    h_scratch[:, :bm] = h1[:80, :]
    h_scratch[:, bm:] = h1[80:, :]
    h = h_scratch[...]                                          # (80, 2*bm)
    h = _leaky_relu(_dot(w2_ref[...], h) + b2_ref[...])         # (80, 2*bm)
    h = _leaky_relu(_dot(w3_ref[...], h) + b3_ref[...])         # (40, 2*bm)
    h = _leaky_relu(_dot(w4_ref[...], h) + b4_ref[...])         # (20, 2*bm)
    z = jnp.sum(w5c_ref[...] * h, axis=0, keepdims=True)        # (1, 2*bm)
    o_ref[...] = z[:, :bm] - z[:, bm:]


# --------------------------------------------------------------------------
# Wrapper
# --------------------------------------------------------------------------
def _block_diag2(w):
    r, c = w.shape
    z = jnp.zeros((r, c), w.dtype)
    top = jnp.concatenate([w, z], axis=1)
    bot = jnp.concatenate([z, w], axis=1)
    return jnp.concatenate([top, bot], axis=0)


def _default_variant():
    try:
        kind = jax.devices()[0].device_kind.lower()
    except Exception:
        return "blockdiag"
    # 128x128-MXU generations keep weights <= 128 wide (lane-stacked branches);
    # 256x256-MXU generations (v6e / v7x) use the block-diagonal sublane stack.
    if any(t in kind for t in ("v2", "v3", "v4", "v5")):
        return "lanestack"
    return "blockdiag"


def init_params(key):
    """Torch-layout parameters: W is (out_features, in_features), b is (out,)."""
    params = []
    for i in range(len(DIMS) - 1):
        fan_in, fan_out = DIMS[i], DIMS[i + 1]
        key, kw, kb = jax.random.split(key, 3)
        bound = 1.0 / (fan_in ** 0.5)
        w = jax.random.uniform(kw, (fan_out, fan_in), jnp.float32, -bound, bound)
        b = jax.random.uniform(kb, (fan_out,), jnp.float32, -bound, bound)
        params.append((w, b))
    return params


@partial(jax.jit, static_argnames=("block_m", "variant"))
def network_forward(x, params, *, block_m=2048, variant="auto"):
    """x: (N, 12) float32. Returns (N, 1) float32 = MLP(x) - MLP(cpx)."""
    if variant == "auto":
        variant = _default_variant()
    assert variant in ("blockdiag", "lanestack")

    n, f = x.shape
    assert f == 12

    # Batch tile: multiple of 128, capped at half the padded batch (when
    # possible) so the "parallel" grid axis has >= 2 steps -> both v7x TCs work.
    block_m = max(128, _round_up(block_m, 128))
    n128 = _round_up(n, 128)
    half = max(128, (n128 // 2) // 128 * 128)
    block_m = min(block_m, half)
    n_pad = _round_up(n, block_m)

    xp = x if n_pad == n else jnp.pad(x, ((0, n_pad - n), (0, 0)))
    xt = xp.T  # (12, n_pad)
    # TODO(synk): for latency-critical small batches, produce x already as
    # (12, N) upstream to avoid this extra pad/transpose pass over HBM.

    (w1, b1), (w2, b2), (w3, b3), (w4, b4), (w5, b5) = params
    del b5  # cancels exactly in MLP(x) - MLP(cpx)

    perm = jnp.array(PERM, dtype=jnp.int32)
    w1b = -w1[:, perm]                                    # cpx branch, folded
    w1s = jnp.concatenate([w1, w1b], axis=0)              # (160, 12)
    b1s = jnp.concatenate([b1, b1]).reshape(-1, 1)        # (160, 1)

    if variant == "blockdiag":
        weights = [
            w1s, b1s,
            _block_diag2(w2), jnp.concatenate([b2, b2]).reshape(-1, 1),
            _block_diag2(w3), jnp.concatenate([b3, b3]).reshape(-1, 1),
            _block_diag2(w4), jnp.concatenate([b4, b4]).reshape(-1, 1),
            jnp.concatenate([w5, -w5], axis=1).reshape(-1, 1),   # (40, 1)
        ]
        kernel = _kernel_blockdiag
        scratch_shapes = []
    else:
        weights = [
            w1s, b1s,
            w2, b2.reshape(-1, 1),
            w3, b3.reshape(-1, 1),
            w4, b4.reshape(-1, 1),
            w5.reshape(-1, 1),                                   # (20, 1)
        ]
        kernel = _kernel_lanestack
        scratch_shapes = [pltpu.VMEM((80, 2 * block_m), jnp.float32)]

    def full(a):
        return pl.BlockSpec(a.shape, lambda i: (0, 0))

    out = pl.pallas_call(
        kernel,
        out_shape=jax.ShapeDtypeStruct((1, n_pad), jnp.float32),
        grid_spec=pltpu.PrefetchScalarGridSpec(
            num_scalar_prefetch=0,
            grid=(n_pad // block_m,),
            in_specs=[pl.BlockSpec((12, block_m), lambda i: (0, i))]
                     + [full(w) for w in weights],
            out_specs=pl.BlockSpec((1, block_m), lambda i: (0, i)),
            scratch_shapes=scratch_shapes,
        ),
        compiler_params=pltpu.CompilerParams(
            dimension_semantics=("parallel",)),
    )(xt, *weights)

    # (1, n_pad) row-major == (n_pad, 1) row-major -> reshape is free.
    return out.reshape(n_pad, 1)[:n]


# --------------------------------------------------------------------------
# Reference + demo
# --------------------------------------------------------------------------
def _reference_forward(x, params):
    """Plain-JAX reference matching the PyTorch module exactly."""
    perm = jnp.array(PERM, dtype=jnp.int32)
    cpx = -x[:, perm]

    def mlp(h):
        for i, (w, b) in enumerate(params):
            h = h @ w.T + b
            if i < len(params) - 1:
                h = jnp.where(h > 0, h, LEAKY_SLOPE * h)
        return h

    return mlp(x) - mlp(cpx)


if __name__ == "__main__":
    key = jax.random.PRNGKey(0)
    kx, kp = jax.random.split(key)

    batch = 300  # non-multiple of 128 -> exercises padding + multi-step grid
    x = jax.random.normal(kx, (batch, 12), dtype=jnp.float32)
    params = init_params(kp)
    ref = _reference_forward(x, params)

    # "auto" picks the generation-appropriate variant; also run both explicit
    # variants to validate each code path against the reference.
    for variant in ("auto", "blockdiag", "lanestack"):
        out = jax.block_until_ready(network_forward(x, params, variant=variant))
        assert out.shape == (batch, 1)
        assert jnp.allclose(out, ref, atol=1e-4, rtol=1e-4), \
            f"mismatch vs reference ({variant})"

    print("KERNEL_OK")
</pallas_src>

<mosaic_0001>
module attributes {stable_mosaic.version = 11 : i64} {
  func.func @_kernel_blockdiag(%arg0: i32, %arg1: memref<12x128xf32, #tpu.memory_space<vmem>>, %arg2: memref<160x12xf32, #tpu.memory_space<vmem>>, %arg3: memref<160x1xf32, #tpu.memory_space<vmem>>, %arg4: memref<160x160xf32, #tpu.memory_space<vmem>>, %arg5: memref<160x1xf32, #tpu.memory_space<vmem>>, %arg6: memref<80x160xf32, #tpu.memory_space<vmem>>, %arg7: memref<80x1xf32, #tpu.memory_space<vmem>>, %arg8: memref<40x80xf32, #tpu.memory_space<vmem>>, %arg9: memref<40x1xf32, #tpu.memory_space<vmem>>, %arg10: memref<40x1xf32, #tpu.memory_space<vmem>>, %arg11: memref<1x128xf32, #tpu.memory_space<vmem>>) attributes {dimension_semantics = [#tpu.dimension_semantics<parallel>], iteration_bounds = array<i64: 3>, scalar_prefetch = 0 : i64, scratch_operands = 0 : i64, tpu.core_type = #tpu.core_type<tc>, window_params = [{transform_indices = @transform_0, window_bounds = array<i64: 12, 128>}, {pipeline_mode = #tpu.pipeline_mode<synchronous>, transform_indices = @transform_1, window_bounds = array<i64: 160, 12>}, {pipeline_mode = #tpu.pipeline_mode<synchronous>, transform_indices = @transform_2, window_bounds = array<i64: 160, 1>}, {pipeline_mode = #tpu.pipeline_mode<synchronous>, transform_indices = @transform_3, window_bounds = array<i64: 160, 160>}, {pipeline_mode = #tpu.pipeline_mode<synchronous>, transform_indices = @transform_4, window_bounds = array<i64: 160, 1>}, {pipeline_mode = #tpu.pipeline_mode<synchronous>, transform_indices = @transform_5, window_bounds = array<i64: 80, 160>}, {pipeline_mode = #tpu.pipeline_mode<synchronous>, transform_indices = @transform_6, window_bounds = array<i64: 80, 1>}, {pipeline_mode = #tpu.pipeline_mode<synchronous>, transform_indices = @transform_7, window_bounds = array<i64: 40, 80>}, {pipeline_mode = #tpu.pipeline_mode<synchronous>, transform_indices = @transform_8, window_bounds = array<i64: 40, 1>}, {pipeline_mode = #tpu.pipeline_mode<synchronous>, transform_indices = @transform_9, window_bounds = array<i64: 40, 1>}, {transform_indices = @transform_10, window_bounds = array<i64: 1, 128>}]} {
    %c0 = arith.constant 0 : index
    %c0_0 = arith.constant 0 : index
    %0 = vector.load %arg1[%c0, %c0_0] : memref<12x128xf32, #tpu.memory_space<vmem>>, vector<12x128xf32>
    %c0_1 = arith.constant 0 : index
    %c0_2 = arith.constant 0 : index
    %1 = vector.load %arg2[%c0_1, %c0_2] : memref<160x12xf32, #tpu.memory_space<vmem>>, vector<160x12xf32>
    %cst = arith.constant dense<0.000000e+00> : vector<160x128xf32>
    %2 = tpu.matmul %1, %0, %cst {dimension_numbers = #tpu.dot_dimension_numbers<[1], [0], [0], [1], [0, 0, 1, 1], [], []>} : vector<160x12xf32>, vector<12x128xf32>, vector<160x128xf32> -> vector<160x128xf32>
    %c0_3 = arith.constant 0 : index
    %c0_4 = arith.constant 0 : index
    %3 = vector.load %arg3[%c0_3, %c0_4] : memref<160x1xf32, #tpu.memory_space<vmem>>, vector<160x1xf32>
    %4 = vector.broadcast %3 : vector<160x1xf32> to vector<160x128xf32>
    %5 = arith.addf %2, %4 : vector<160x128xf32>
    %cst_5 = arith.constant 0.00999999977 : f32
    %6 = vector.broadcast %cst_5 : f32 to vector<160x128xf32>
    %7 = arith.mulf %6, %5 : vector<160x128xf32>
    %8 = arith.maximumf %5, %7 : vector<160x128xf32>
    %c0_6 = arith.constant 0 : index
    %c0_7 = arith.constant 0 : index
    %9 = vector.load %arg4[%c0_6, %c0_7] : memref<160x160xf32, #tpu.memory_space<vmem>>, vector<160x160xf32>
    %cst_8 = arith.constant dense<0.000000e+00> : vector<160x128xf32>
    %10 = tpu.matmul %9, %8, %cst_8 {dimension_numbers = #tpu.dot_dimension_numbers<[1], [0], [0], [1], [0, 0, 1, 1], [], []>} : vector<160x160xf32>, vector<160x128xf32>, vector<160x128xf32> -> vector<160x128xf32>
    %c0_9 = arith.constant 0 : index
    %c0_10 = arith.constant 0 : index
    %11 = vector.load %arg5[%c0_9, %c0_10] : memref<160x1xf32, #tpu.memory_space<vmem>>, vector<160x1xf32>
    %12 = vector.broadcast %11 : vector<160x1xf32> to vector<160x128xf32>
    %13 = arith.addf %10, %12 : vector<160x128xf32>
    %cst_11 = arith.constant 0.00999999977 : f32
    %14 = vector.broadcast %cst_11 : f32 to vector<160x128xf32>
    %15 = arith.mulf %14, %13 : vector<160x128xf32>
    %16 = arith.maximumf %13, %15 : vector<160x128xf32>
    %c0_12 = arith.constant 0 : index
    %c0_13 = arith.constant 0 : index
    %17 = vector.load %arg6[%c0_12, %c0_13] : memref<80x160xf32, #tpu.memory_space<vmem>>, vector<80x160xf32>
    %cst_14 = arith.constant dense<0.000000e+00> : vector<80x128xf32>
    %18 = tpu.matmul %17, %16, %cst_14 {dimension_numbers = #tpu.dot_dimension_numbers<[1], [0], [0], [1], [0, 0, 1, 1], [], []>} : vector<80x160xf32>, vector<160x128xf32>, vector<80x128xf32> -> vector<80x128xf32>
    %c0_15 = arith.constant 0 : index
    %c0_16 = arith.constant 0 : index
    %19 = vector.load %arg7[%c0_15, %c0_16] : memref<80x1xf32, #tpu.memory_space<vmem>>, vector<80x1xf32>
    %20 = vector.broadcast %19 : vector<80x1xf32> to vector<80x128xf32>
    %21 = arith.addf %18, %20 : vector<80x128xf32>
    %cst_17 = arith.constant 0.00999999977 : f32
    %22 = vector.broadcast %cst_17 : f32 to vector<80x128xf32>
    %23 = arith.mulf %22, %21 : vector<80x128xf32>
    %24 = arith.maximumf %21, %23 : vector<80x128xf32>
    %c0_18 = arith.constant 0 : index
    %c0_19 = arith.constant 0 : index
    %25 = vector.load %arg8[%c0_18, %c0_19] : memref<40x80xf32, #tpu.memory_space<vmem>>, vector<40x80xf32>
    %cst_20 = arith.constant dense<0.000000e+00> : vector<40x128xf32>
    %26 = tpu.matmul %25, %24, %cst_20 {dimension_numbers = #tpu.dot_dimension_numbers<[1], [0], [0], [1], [0, 0, 1, 1], [], []>} : vector<40x80xf32>, vector<80x128xf32>, vector<40x128xf32> -> vector<40x128xf32>
    %c0_21 = arith.constant 0 : index
    %c0_22 = arith.constant 0 : index
    %27 = vector.load %arg9[%c0_21, %c0_22] : memref<40x1xf32, #tpu.memory_space<vmem>>, vector<40x1xf32>
    %28 = vector.broadcast %27 : vector<40x1xf32> to vector<40x128xf32>
    %29 = arith.addf %26, %28 : vector<40x128xf32>
    %cst_23 = arith.constant 0.00999999977 : f32
    %30 = vector.broadcast %cst_23 : f32 to vector<40x128xf32>
    %31 = arith.mulf %30, %29 : vector<40x128xf32>
    %32 = arith.maximumf %29, %31 : vector<40x128xf32>
    %c0_24 = arith.constant 0 : index
    %c0_25 = arith.constant 0 : index
    %33 = vector.load %arg10[%c0_24, %c0_25] : memref<40x1xf32, #tpu.memory_space<vmem>>, vector<40x1xf32>
    %34 = vector.broadcast %33 : vector<40x1xf32> to vector<40x128xf32>
    %35 = arith.mulf %34, %32 : vector<40x128xf32>
    %cst_26 = arith.constant dense<0.000000e+00> : vector<128xf32>
    %36 = vector.multi_reduction <add>, %35, %cst_26 [0] : vector<40x128xf32> to vector<128xf32>
    %37 = vector.shape_cast %36 : vector<128xf32> to vector<1x128xf32>
    %c0_27 = arith.constant 0 : index
    %c0_28 = arith.constant 0 : index
    %38 = vector.load %arg11[%c0_27, %c0_28] : memref<1x128xf32, #tpu.memory_space<vmem>>, vector<1x128xf32>
    tpu.vector_store %arg11[%c0_27, %c0_28], %37 {strides = array<i32>} : memref<1x128xf32, #tpu.memory_space<vmem>>, vector<1x128xf32>,
    return
  }
  func.func @transform_0(%arg0: i32) -> (i32, i32) {
    %c0_i32 = arith.constant 0 : i32
    %c0_i32_0 = arith.constant 0 : i32
    return %c0_i32, %arg0 : i32, i32
  }
  func.func @transform_1(%arg0: i32) -> (i32, i32) {
    %c0_i32 = arith.constant 0 : i32
    %c0_i32_0 = arith.constant 0 : i32
    %c0_i32_1 = arith.constant 0 : i32
    return %c0_i32, %c0_i32_0 : i32, i32
  }
  func.func @transform_2(%arg0: i32) -> (i32, i32) {
    %c0_i32 = arith.constant 0 : i32
    %c0_i32_0 = arith.constant 0 : i32
    %c0_i32_1 = arith.constant 0 : i32
    return %c0_i32, %c0_i32_0 : i32, i32
  }
  func.func @transform_3(%arg0: i32) -> (i32, i32) {
    %c0_i32 = arith.constant 0 : i32
    %c0_i32_0 = arith.constant 0 : i32
    %c0_i32_1 = arith.constant 0 : i32
    return %c0_i32, %c0_i32_0 : i32, i32
  }
  func.func @transform_4(%arg0: i32) -> (i32, i32) {
    %c0_i32 = arith.constant 0 : i32
    %c0_i32_0 = arith.constant 0 : i32
    %c0_i32_1 = arith.constant 0 : i32
    return %c0_i32, %c0_i32_0 : i32, i32
  }
  func.func @transform_5(%arg0: i32) -> (i32, i32) {
    %c0_i32 = arith.constant 0 : i32
    %c0_i32_0 = arith.constant 0 : i32
    %c0_i32_1 = arith.constant 0 : i32
    return %c0_i32, %c0_i32_0 : i32, i32
  }
  func.func @transform_6(%arg0: i32) -> (i32, i32) {
    %c0_i32 = arith.constant 0 : i32
    %c0_i32_0 = arith.constant 0 : i32
    %c0_i32_1 = arith.constant 0 : i32
    return %c0_i32, %c0_i32_0 : i32, i32
  }
  func.func @transform_7(%arg0: i32) -> (i32, i32) {
    %c0_i32 = arith.constant 0 : i32
    %c0_i32_0 = arith.constant 0 : i32
    %c0_i32_1 = arith.constant 0 : i32
    return %c0_i32, %c0_i32_0 : i32, i32
  }
  func.func @transform_8(%arg0: i32) -> (i32, i32) {
    %c0_i32 = arith.constant 0 : i32
    %c0_i32_0 = arith.constant 0 : i32
    %c0_i32_1 = arith.constant 0 : i32
    return %c0_i32, %c0_i32_0 : i32, i32
  }
  func.func @transform_9(%arg0: i32) -> (i32, i32) {
    %c0_i32 = arith.constant 0 : i32
    %c0_i32_0 = arith.constant 0 : i32
    %c0_i32_1 = arith.constant 0 : i32
    return %c0_i32, %c0_i32_0 : i32, i32
  }
  func.func @transform_10(%arg0: i32) -> (i32, i32) {
    %c0_i32 = arith.constant 0 : i32
    %c0_i32_0 = arith.constant 0 : i32
    return %c0_i32, %arg0 : i32, i32
  }
}

</mosaic_0001>

<llo_original>
// kernel: neg.3
$region0: #{neg.3}
  #allocation0 [shape = 's32[1]{0}', space=sflag, size = 0x4, scoped, tag = 'scoped memory for neg.3']
  %s0 = inlined_call_operand.vmem [shape: f32[1,20], index: 0, kind: input, shape index: {}]
  %s1 = inlined_call_operand.vmem [shape: f32[1,20], index: 1, kind: output, shape index: {}]
  %v2 = vld [vmem:[%s0] sm:$0x1]
  %3 = xla_tuple %v2
  %4 = xla_tuple %3
  %v5 = vxor.u32 %v2, 2147483648
  %6 = xla_tuple %v5
  %7 = vst [vmem:[%s1] sm:$0x1] %v5

// kernel: network_forward.1
$region0: #{network_forward.1}
  #allocation0 [shape = 'u32[]', space=smem, size = 0x4, offset = 0x4, fixed_abs, tag = 'smem constant byte address 0x4 - core index']
  #allocation1 [shape = 'u32[144,128]{1,0:T(1,128)}', space=vmem, size = 0x12000, scoped, tag = 'internal scratch']
  %s0 = inlined_call_operand.vmem [shape: f32[12,384], index: 0, kind: input, shape index: {}]
  %s1 = inlined_call_operand.vmem [shape: f32[160,12], index: 1, kind: input, shape index: {}]
  %s2 = inlined_call_operand.vmem [shape: f32[160,1], index: 2, kind: input, shape index: {}]
  %s3 = inlined_call_operand.vmem [shape: f32[160,160], index: 3, kind: input, shape index: {}]
  %s4 = inlined_call_operand.vmem [shape: f32[160,1], index: 4, kind: input, shape index: {}]
  %s5 = inlined_call_operand.vmem [shape: f32[80,160], index: 5, kind: input, shape index: {}]
  %s6 = inlined_call_operand.vmem [shape: f32[80,1], index: 6, kind: input, shape index: {}]
  %s7 = inlined_call_operand.vmem [shape: f32[40,80], index: 7, kind: input, shape index: {}]
  %s8 = inlined_call_operand.vmem [shape: f32[40,1], index: 8, kind: input, shape index: {}]
  %s9 = inlined_call_operand.vmem [shape: f32[40,1], index: 9, kind: input, shape index: {}]
  %s10 = inlined_call_operand.vmem [shape: f32[1,384], index: 10, kind: output, shape index: {}]
  %s11 = sld [smem:[#allocation0]]
  $region111: #{network_forward.1} parent=0
    _
  %s13 = ssub.s32 1, %s11
  %s14 = scalar_select 0, %s13, %s11
  $region1: #{network_forward.1} parent=0
    #allocation2 [shape = 'u8[16384]{0}', space=vmem, size = 0x4000, scoped, tag = 'input window, operand 0']
    loop: start=0, step=1, limit=5
    $region2: #{network_forward.1} parent=1 // loop_pre_header
      _
    $region3: #{network_forward.1} parent=1 // loop_header
      %s16 = sphi 0, %s20
      %p17 = scmp.ge.s32.totalorder %s16, 5
      %s26 = sphi 0, %s28
      %s29 = sphi 0, %s26
      %s30 = sphi 0, %s29
      %s46 = sphi 0, %s30
      %s50 = sphi 0, %s50
      %s52 = sphi 0, %s50
      %s53 = sphi 0, %s52
      %s67 = sphi 0, %s53
      %s71 = sphi 0, %s71
      %s73 = sphi 0, %s71
      %s74 = sphi 0, %s73
      %s88 = sphi 0, %s74
      %s92 = sphi 0, %s92
      %s94 = sphi 0, %s92
      %s95 = sphi 0, %s94
      %s109 = sphi 0, %s95
      %s113 = sphi 0, %s113
      %s115 = sphi 0, %s113
      %s116 = sphi 0, %s115
      %s130 = sphi 0, %s116
      %s134 = sphi 0, %s134
      %s136 = sphi 0, %s134
      %s137 = sphi 0, %s136
      %s151 = sphi 0, %s137
      %s155 = sphi 0, %s155
      %s157 = sphi 0, %s155
      %s158 = sphi 0, %s157
      %s172 = sphi 0, %s158
      %s176 = sphi 0, %s176
      %s178 = sphi 0, %s176
      %s179 = sphi 0, %s178
      %s193 = sphi 0, %s179
      %s197 = sphi 0, %s197
      %s199 = sphi 0, %s197
      %s200 = sphi 0, %s199
      %s214 = sphi 0, %s200
      %s218 = sphi 0, %s218
      %s220 = sphi 0, %s218
      %s221 = sphi 0, %s220
      %s235 = sphi 0, %s221
      %s241 = sphi 0, %s243
      %s244 = sphi 0, %s241
      %s245 = sphi 0, %s244
      %s261 = sphi 0, %s245
    $region4: #{network_forward.1} parent=1 // loop_header_branch
      %19 = sbr.rel (%p17) target = $region8
    $region5: #{network_forward.1} parent=1 // loop_body
      %s21 = ssub.s32 %s16, 1
      %s22 = ssub.s32 %s16, 2
      %s23 = sadd.s32 %s16, 1
      %s24 = ssub.s32 %s16, %s23
      %p25 = scmp.eq.s32.totalorder %s24, 0
      %s27 = sadd.s32 %s26, 1
      %s28 = scalar_select %p25, %s26, %s27
      %p31 = pneg %p25
      %p32 = scmp.eq.s32.totalorder %s16, 2
      %p33 = por %p31, %p32
      %p34 = scmp.ne.s32.totalorder %s26, %s29
      %p35 = scmp.eq.s32.totalorder %s16, 0
      %p36 = por %p34, %p35
      %p37 = scmp.ne.s32.totalorder %s26, %s29
      %p38 = scmp.eq.s32.totalorder %s21, 2
      %p39 = por %p37, %p38
      %p40 = scmp.ne.s32.totalorder %s29, %s30
      %p41 = scmp.eq.s32.totalorder %s21, 0
      %p42 = por %p40, %p41
      %p43 = scmp.ne.s32.totalorder %s29, %s30
      %p44 = scmp.eq.s32.totalorder %s22, 2
      %p45 = por %p43, %p44
      %p47 = scmp.ne.s32.totalorder %s30, %s46
      %p48 = scmp.eq.s32.totalorder %s22, 0
      %p49 = por %p47, %p48
      %s51 = sadd.s32 %s50, 1
      %p54 = scmp.eq.s32.totalorder %s16, 2
      %p55 = scmp.ne.s32.totalorder %s50, %s52
      %p56 = scmp.eq.s32.totalorder %s16, 0
      %p57 = por %p55, %p56
      %p58 = scmp.ne.s32.totalorder %s50, %s52
      %p59 = scmp.eq.s32.totalorder %s21, 2
      %p60 = por %p58, %p59
      %p61 = scmp.ne.s32.totalorder %s52, %s53
      %p62 = scmp.eq.s32.totalorder %s21, 0
      %p63 = por %p61, %p62
      %p64 = scmp.ne.s32.totalorder %s52, %s53
      %p65 = scmp.eq.s32.totalorder %s22, 2
      %p66 = por %p64, %p65
      %p68 = scmp.ne.s32.totalorder %s53, %s67
      %p69 = scmp.eq.s32.totalorder %s22, 0
      %p70 = por %p68, %p69
      %s72 = sadd.s32 %s71, 1
      %p75 = scmp.eq.s32.totalorder %s16, 2
      %p76 = scmp.ne.s32.totalorder %s71, %s73
      %p77 = scmp.eq.s32.totalorder %s16, 0
      %p78 = por %p76, %p77
      %p79 = scmp.ne.s32.totalorder %s71, %s73
      %p80 = scmp.eq.s32.totalorder %s21, 2
      %p81 = por %p79, %p80
      %p82 = scmp.ne.s32.totalorder %s73, %s74
      %p83 = scmp.eq.s32.totalorder %s21, 0
      %p84 = por %p82, %p83
      %p85 = scmp.ne.s32.totalorder %s73, %s74
      %p86 = scmp.eq.s32.totalorder %s22, 2
      %p87 = por %p85, %p86
      %p89 = scmp.ne.s32.totalorder %s74, %s88
      %p90 = scmp.eq.s32.totalorder %s22, 0
      %p91 = por %p89, %p90
      %s93 = sadd.s32 %s92, 1
      %p96 = scmp.eq.s32.totalorder %s16, 2
      %p97 = scmp.ne.s32.totalorder %s92, %s94
      %p98 = scmp.eq.s32.totalorder %s16, 0
      %p99 = por %p97, %p98
      %p100 = scmp.ne.s32.totalorder %s92, %s94
      %p101 = scmp.eq.s32.totalorder %s21, 2
      %p102 = por %p100, %p101
      %p103 = scmp.ne.s32.totalorder %s94, %s95
      %p104 = scmp.eq.s32.totalorder %s21, 0
      %p105 = por %p103, %p104
      %p106 = scmp.ne.s32.totalorder %s94, %s95
      %p107 = scmp.eq.s32.totalorder %s22, 2
      %p108 = por %p106, %p107
      %p110 = scmp.ne.s32.totalorder %s95, %s109
      %p111 = scmp.eq.s32.totalorder %s22, 0
      %p112 = por %p110, %p111
      %s114 = sadd.s32 %s113, 1
      %p117 = scmp.eq.s32.totalorder %s16, 2
      %p118 = scmp.ne.s32.totalorder %s113, %s115
      %p119 = scmp.eq.s32.totalorder %s16, 0
      %p120 = por %p118, %p119
      %p121 = scmp.ne.s32.totalorder %s113, %s115
      %p122 = scmp.eq.s32.totalorder %s21, 2
      %p123 = por %p121, %p122
      %p124 = scmp.ne.s32.totalorder %s115, %s116
      %p125 = scmp.eq.s32.totalorder %s21, 0
      %p126 = por %p124, %p125
      %p127 = scmp.ne.s32.totalorder %s115, %s116
      %p128 = scmp.eq.s32.totalorder %s22, 2
      %p129 = por %p127, %p128
      %p131 = scmp.ne.s32.totalorder %s116, %s130
      %p132 = scmp.eq.s32.totalorder %s22, 0
      %p133 = por %p131, %p132
      %s135 = sadd.s32 %s134, 1
      %p138 = scmp.eq.s32.totalorder %s16, 2
      %p139 = scmp.ne.s32.totalorder %s134, %s136
      %p140 = scmp.eq.s32.totalorder %s16, 0
      %p141 = por %p139, %p140
      %p142 = scmp.ne.s32.totalorder %s134, %s136
      %p143 = scmp.eq.s32.totalorder %s21, 2
      %p144 = por %p142, %p143
      %p145 = scmp.ne.s32.totalorder %s136, %s137
      %p146 = scmp.eq.s32.totalorder %s21, 0
      %p147 = por %p145, %p146
      %p148 = scmp.ne.s32.totalorder %s136, %s137
      %p149 = scmp.eq.s32.totalorder %s22, 2
      %p150 = por %p148, %p149
      %p152 = scmp.ne.s32.totalorder %s137, %s151
      %p153 = scmp.eq.s32.totalorder %s22, 0
      %p154 = por %p152, %p153
      %s156 = sadd.s32 %s155, 1
      %p159 = scmp.eq.s32.totalorder %s16, 2
      %p160 = scmp.ne.s32.totalorder %s155, %s157
      %p161 = scmp.eq.s32.totalorder %s16, 0
      %p162 = por %p160, %p161
      %p163 = scmp.ne.s32.totalorder %s155, %s157
      %p164 = scmp.eq.s32.totalorder %s21, 2
      %p165 = por %p163, %p164
      %p166 = scmp.ne.s32.totalorder %s157, %s158
      %p167 = scmp.eq.s32.totalorder %s21, 0
      %p168 = por %p166, %p167
      %p169 = scmp.ne.s32.totalorder %s157, %s158
      %p170 = scmp.eq.s32.totalorder %s22, 2
      %p171 = por %p169, %p170
      %p173 = scmp.ne.s32.totalorder %s158, %s172
      %p174 = scmp.eq.s32.totalorder %s22, 0
      %p175 = por %p173, %p174
      %s177 = sadd.s32 %s176, 1
      %p180 = scmp.eq.s32.totalorder %s16, 2
      %p181 = scmp.ne.s32.totalorder %s176, %s178
      %p182 = scmp.eq.s32.totalorder %s16, 0
      %p183 = por %p181, %p182
      %p184 = scmp.ne.s32.totalorder %s176, %s178
      %p185 = scmp.eq.s32.totalorder %s21, 2
      %p186 = por %p184, %p185
      %p187 = scmp.ne.s32.totalorder %s178, %s179
      %p188 = scmp.eq.s32.totalorder %s21, 0
      %p189 = por %p187, %p188
      %p190 = scmp.ne.s32.totalorder %s178, %s179
      %p191 = scmp.eq.s32.totalorder %s22, 2
      %p192 = por %p190, %p191
      %p194 = scmp.ne.s32.totalorder %s179, %s193
      %p195 = scmp.eq.s32.totalorder %s22, 0
      %p196 = por %p194, %p195
      %s198 = sadd.s32 %s197, 1
      %p201 = scmp.eq.s32.totalorder %s16, 2
      %p202 = scmp.ne.s32.totalorder %s197, %s199
      %p203 = scmp.eq.s32.totalorder %s16, 0
      %p204 = por %p202, %p203
      %p205 = scmp.ne.s32.totalorder %s197, %s199
      %p206 = scmp.eq.s32.totalorder %s21, 2
      %p207 = por %p205, %p206
      %p208 = scmp.ne.s32.totalorder %s199, %s200
      %p209 = scmp.eq.s32.totalorder %s21, 0
      %p210 = por %p208, %p209
      %p211 = scmp.ne.s32.totalorder %s199, %s200
      %p212 = scmp.eq.s32.totalorder %s22, 2
      %p213 = por %p211, %p212
      %p215 = scmp.ne.s32.totalorder %s200, %s214
      %p216 = scmp.eq.s32.totalorder %s22, 0
      %p217 = por %p215, %p216
      %s219 = sadd.s32 %s218, 1
      %p222 = scmp.eq.s32.totalorder %s16, 2
      %p223 = scmp.ne.s32.totalorder %s218, %s220
      %p224 = scmp.eq.s32.totalorder %s16, 0
      %p225 = por %p223, %p224
      %p226 = scmp.ne.s32.totalorder %s218, %s220
      %p227 = scmp.eq.s32.totalorder %s21, 2
      %p228 = por %p226, %p227
      %p229 = scmp.ne.s32.totalorder %s220, %s221
      %p230 = scmp.eq.s32.totalorder %s21, 0
      %p231 = por %p229, %p230
      %p232 = scmp.ne.s32.totalorder %s220, %s221
      %p233 = scmp.eq.s32.totalorder %s22, 2
      %p234 = por %p232, %p233
      %p236 = scmp.ne.s32.totalorder %s221, %s235
      %p237 = scmp.eq.s32.totalorder %s22, 0
      %p238 = por %p236, %p237
      %s239 = ssub.s32 %s16, %s23
      %p240 = scmp.eq.s32.totalorder %s239, 0
      %s242 = sadd.s32 %s241, 1
      %s243 = scalar_select %p240, %s241, %s242
      %p246 = pneg %p240
      %p247 = scmp.eq.s32.totalorder %s16, 2
      %p248 = por %p246, %p247
      %p249 = scmp.ne.s32.totalorder %s241, %s244
      %p250 = scmp.eq.s32.totalorder %s16, 0
      %p251 = por %p249, %p250
      %p252 = scmp.ne.s32.totalorder %s241, %s244
      %p253 = scmp.eq.s32.totalorder %s21, 2
      %p254 = por %p252, %p253
      %p255 = scmp.ne.s32.totalorder %s244, %s245
      %p256 = scmp.eq.s32.totalorder %s21, 0
      %p257 = por %p255, %p256
      %p258 = scmp.ne.s32.totalorder %s244, %s245
      %p259 = scmp.eq.s32.totalorder %s22, 2
      %p260 = por %p258, %p259
      %p262 = scmp.ne.s32.totalorder %s245, %s261
      %p263 = scmp.eq.s32.totalorder %s22, 0
      %p264 = por %p262, %p263
      %p265 = scmp.le.s32.totalorder 1, %s16
      %p266 = scmp.lt.s32.totalorder %s16, 4
      %p267 = pnand %p265, %p266
      %p268 = pneg %p267
      // Predicated region
      $region9: #{network_forward.1} parent=5 // pred_check
        _
      $region10: #{network_forward.1} parent=5 // pred_check_branch
        %270 = sbr.rel (%p267) target = $region12
      $region11: #{network_forward.1} parent=5 // pred_region
        %s271 = ssub.s32 %s16, 1
        // Predicated region
        $region13: #{network_forward.1} parent=11 // pred_check
          %p272 = pneg %p63
        $region14: #{network_forward.1} parent=11 // pred_check_branch
          %274 = sbr.rel (%p272) target = $region16
        $region15: #{network_forward.1} parent=11 // pred_region
          _
        $region16: #{network_forward.1} parent=11 // pred_fallthru
          _
        // Predicated region
        $region17: #{network_forward.1} parent=11 // pred_check
          %p275 = pneg %p84
        $region18: #{network_forward.1} parent=11 // pred_check_branch
          %277 = sbr.rel (%p275) target = $region20
        $region19: #{network_forward.1} parent=11 // pred_region
          _
        $region20: #{network_forward.1} parent=11 // pred_fallthru
          _
        // Predicated region
        $region21: #{network_forward.1} parent=11 // pred_check
          %p278 = pneg %p105
        $region22: #{network_forward.1} parent=11 // pred_check_branch
          %280 = sbr.rel (%p278) target = $region24
        $region23: #{network_forward.1} parent=11 // pred_region
          _
        $region24: #{network_forward.1} parent=11 // pred_fallthru
          _
        // Predicated region
        $region25: #{network_forward.1} parent=11 // pred_check
          %p281 = pneg %p126
        $region26: #{network_forward.1} parent=11 // pred_check_branch
          %283 = sbr.rel (%p281) target = $region28
        $region27: #{network_forward.1} parent=11 // pred_region
          _
        $region28: #{network_forward.1} parent=11 // pred_fallthru
          _
        // Predicated region
        $region29: #{network_forward.1} parent=11 // pred_check
          %p284 = pneg %p147
        $region30: #{network_forward.1} parent=11 // pred_check_branch
          %286 = sbr.rel (%p284) target = $region32
        $region31: #{network_forward.1} parent=11 // pred_region
          _
        $region32: #{network_forward.1} parent=11 // pred_fallthru
          _
        // Predicated region
        $region33: #{network_forward.1} parent=11 // pred_check
          %p287 = pneg %p168
        $region34: #{network_forward.1} parent=11 // pred_check_branch
          %289 = sbr.rel (%p287) target = $region36
        $region35: #{network_forward.1} parent=11 // pred_region
          _
        $region36: #{network_forward.1} parent=11 // pred_fallthru
          _
        // Predicated region
        $region37: #{network_forward.1} parent=11 // pred_check
          %p290 = pneg %p189
        $region38: #{network_forward.1} parent=11 // pred_check_branch
          %292 = sbr.rel (%p290) target = $region40
        $region39: #{network_forward.1} parent=11 // pred_region
          _
        $region40: #{network_forward.1} parent=11 // pred_fallthru
          _
        // Predicated region
        $region41: #{network_forward.1} parent=11 // pred_check
          %p293 = pneg %p210
        $region42: #{network_forward.1} parent=11 // pred_check_branch
          %295 = sbr.rel (%p293) target = $region44
        $region43: #{network_forward.1} parent=11 // pred_region
          _
        $region44: #{network_forward.1} parent=11 // pred_fallthru
          _
        // Predicated region
        $region45: #{network_forward.1} parent=11 // pred_check
          %p296 = pneg %p231
        $region46: #{network_forward.1} parent=11 // pred_check_branch
          %298 = sbr.rel (%p296) target = $region48
        $region47: #{network_forward.1} parent=11 // pred_region
          _
        $region48: #{network_forward.1} parent=11 // pred_fallthru
          _
      $region12: #{network_forward.1} parent=5 // pred_fallthru
        _
      %p299 = scmp.lt.s32.totalorder %s16, 3
      // Predicated region
      $region49: #{network_forward.1} parent=5 // pred_check
        %p300 = pneg %p299
      $region50: #{network_forward.1} parent=5 // pred_check_branch
        %302 = sbr.rel (%p300) target = $region52
      $region51: #{network_forward.1} parent=5 // pred_region
        // Predicated region
        $region53: #{network_forward.1} parent=51 // pred_check
          %p303 = pneg %p36
        $region54: #{network_forward.1} parent=51 // pred_check_branch
          %305 = sbr.rel (%p303) target = $region56
        $region55: #{network_forward.1} parent=51 // pred_region
          %s306 = sand.u32 %s26, 1
          %s307 = sand.u32 %s26, 1
          %s308 = smul.addr %s307, 16
          %s309 = scalar_lea.vmem [#allocation2], %s308
          %s310 = smul.addr %s16, 8
          %s311 = scalar_lea.vmem %s0, %s310
          // Predicated region
          $region57: #{network_forward.1} parent=55 // pred_check
            _
          $region58: #{network_forward.1} parent=55 // pred_check_branch
            %313 = sbr.rel (0) target = $region60
          $region59: #{network_forward.1} parent=55 // pred_region
            // Predicated region
            $region61: #{network_forward.1} parent=59 // pred_check
              _
            $region62: #{network_forward.1} parent=59 // pred_check_branch
              %315 = sbr.rel (0) target = $region64
            $region63: #{network_forward.1} parent=59 // pred_region
              // Predicated region
              $region76: #{network_forward.1} parent=63 // pred_check
                _
              $region77: #{network_forward.1} parent=63 // pred_check_branch
                %333 = sbr.rel (0) target = $region79
              $region78: #{network_forward.1} parent=63 // pred_region
                loop: start=0, step=1, limit=1
                $region80: #{network_forward.1} parent=78 // loop_pre_header
                  _
                $region81: #{network_forward.1} parent=78 // loop_header
                  %s335 = sphi 0, %s339
                  %p336 = scmp.ge.s32.totalorder %s335, 1
                  %s340 = sphi %s311, %s311
                  %s341 = sphi %s309, %s309
                $region82: #{network_forward.1} parent=78 // loop_header_branch
                  %338 = sbr.rel (%p336) target = $region86
                $region83: #{network_forward.1} parent=78 // loop_body
                  %v342 = vld [vmem:[%s340] sm:$0xff]
                  %343 = vst [vmem:[%s341] sm:$0xff] %v342
                  %v344 = vld [vmem:[%s340 + $0x18] sm:$0xff]
                  %345 = vst [vmem:[%s341 + $0x8] sm:$0xff] %v344
                $region84: #{network_forward.1} parent=78 // loop_footer
                  %s339 = sadd.s32 1, %s335
                $region85: #{network_forward.1} parent=78 // loop_footer_branch
                  %334 = sbr.rel target = $region81
                $region86: #{network_forward.1} parent=78 // loop_exit
                  _
              $region79: #{network_forward.1} parent=63 // pred_fallthru
                _
              // Predicated region
              $region87: #{network_forward.1} parent=63 // pred_check
                _
              $region88: #{network_forward.1} parent=63 // pred_check_branch
                %347 = sbr.rel target = $region90
              $region89: #{network_forward.1} parent=63 // pred_region
                _
              $region90: #{network_forward.1} parent=63 // pred_fallthru
                _
            $region64: #{network_forward.1} parent=59 // pred_fallthru
              _
            // Predicated region
            $region65: #{network_forward.1} parent=59 // pred_check
              _
            $region66: #{network_forward.1} parent=59 // pred_check_branch
              %317 = sbr.rel target = $region68
            $region67: #{network_forward.1} parent=59 // pred_region
              %s319 = ssub.s32 256, 1
              loop: start=0, step=1, limit=1
              $region69: #{network_forward.1} parent=67 // loop_pre_header
                _
              $region70: #{network_forward.1} parent=67 // loop_header
                %s321 = sphi 0, %s325
                %p322 = scmp.ge.s32.totalorder %s321, 1
                %s326 = sphi %s311, %s311
                %s327 = sphi %s309, %s309
              $region71: #{network_forward.1} parent=67 // loop_header_branch
                %324 = sbr.rel (%p322) target = $region75
              $region72: #{network_forward.1} parent=67 // loop_body
                %v328 = vld [vmem:[%s326] sm:%s319]
                %329 = vst [vmem:[%s327] sm:%s319] %v328
                %v330 = vld [vmem:[%s326 + $0x18] sm:%s319]
                %331 = vst [vmem:[%s327 + $0x8] sm:%s319] %v330
              $region73: #{network_forward.1} parent=67 // loop_footer
                %s325 = sadd.s32 1, %s321
              $region74: #{network_forward.1} parent=67 // loop_footer_branch
                %320 = sbr.rel target = $region70
              $region75: #{network_forward.1} parent=67 // loop_exit
                _
            $region68: #{network_forward.1} parent=59 // pred_fallthru
              _
          $region60: #{network_forward.1} parent=55 // pred_fallthru
            _
          %348 = vnop
        $region56: #{network_forward.1} parent=51 // pred_fallthru
          _
      $region52: #{network_forward.1} parent=5 // pred_fallthru
        _
      %p349 = scmp.le.s32.totalorder 1, %s16
      %p350 = scmp.lt.s32.totalorder %s16, 4
      %p351 = pnand %p349, %p350
      %p352 = pneg %p351
      // Predicated region
      $region91: #{network_forward.1} parent=5 // pred_check
        _
      $region92: #{network_forward.1} parent=5 // pred_check_branch
        %354 = sbr.rel (%p351) target = $region94
      $region93: #{network_forward.1} parent=5 // pred_region
        %s355 = ssub.s32 %s16, 1
        %s356 = sand.u32 %s29, 1
        %s357 = sand.u32 %s29, 1
        %s358 = smul.addr %s357, 16
        %s359 = scalar_lea.vmem [#allocation2], %s358
        // Predicated region
        $region95: #{network_forward.1} parent=93 // pred_check
          %p360 = pneg %p42
        $region96: #{network_forward.1} parent=93 // pred_check_branch
          %362 = sbr.rel (%p360) target = $region98
        $region97: #{network_forward.1} parent=93 // pred_region
          _
        $region98: #{network_forward.1} parent=93 // pred_fallthru
          _
        %s363 = sand.u32 %s29, 1
        %s364 = sand.u32 %s29, 1
        %s365 = smul.addr %s364, 16
        %s366 = scalar_lea.vmem [#allocation2], %s365
        %p367 = pneg %p42
        %p368 = pneg %p39
        %p369 = pneg %p63
        %p370 = pneg %p60
        %p371 = pneg %p84
        %p372 = pneg %p81
        %p373 = pneg %p105
        %p374 = pneg %p102
        %p375 = pneg %p126
        %p376 = pneg %p123
        %p377 = pneg %p147
        %p378 = pneg %p144
        %p379 = pneg %p168
        %p380 = pneg %p165
        %p381 = pneg %p189
        %p382 = pneg %p186
        %p383 = pneg %p210
        %p384 = pneg %p207
        %p385 = pneg %p231
        %p386 = pneg %p228
        %p387 = pneg %p257
        %p388 = pneg %p254
        %p389 = scmp.lt.s32.totalorder %s21, 2
        %s390 = scalar_select %p389, %s21, 2
        %s391 = scalar_lea.vmem %s10, %s390
        %p392 = scmp.lt.s32.totalorder %s21, 2
        %s393 = scalar_select %p392, %s21, 2
        %s394 = scalar_lea.vmem %s10, %s393
        %v395 = vld [vmem:[%s359] sm:$0xff]
        %v396 = vld [vmem:[%s359 + $0x8] sm:$0xf]
        %v397 = vld [vmem:[%s1] sm:$0xff]
        %v398 = vld [vmem:[%s1 + $0x8] sm:$0xff]
        %v399 = vld [vmem:[%s1 + $0x10] sm:$0xff]
        %v400 = vld [vmem:[%s1 + $0x18] sm:$0xff]
        %v401 = vld [vmem:[%s1 + $0x20] sm:$0xff]
        %v402 = vld [vmem:[%s1 + $0x28] sm:$0xff]
        %v403 = vld [vmem:[%s1 + $0x30] sm:$0xff]
        %v404 = vld [vmem:[%s1 + $0x38] sm:$0xff]
        %v405 = vld [vmem:[%s1 + $0x40] sm:$0xff]
        %v406 = vld [vmem:[%s1 + $0x48] sm:$0xff]
        %v407 = vld [vmem:[%s1 + $0x50] sm:$0xff]
        %v408 = vld [vmem:[%s1 + $0x58] sm:$0xff]
        %v409 = vld [vmem:[%s1 + $0x60] sm:$0xff]
        %v410 = vld [vmem:[%s1 + $0x68] sm:$0xff]
        %v411 = vld [vmem:[%s1 + $0x70] sm:$0xff]
        %v412 = vld [vmem:[%s1 + $0x78] sm:$0xff]
        %v413 = vld [vmem:[%s1 + $0x80] sm:$0xff]
        %v414 = vld [vmem:[%s1 + $0x88] sm:$0xff]
        %v415 = vld [vmem:[%s1 + $0x90] sm:$0xff]
        %v416 = vld [vmem:[%s1 + $0x98] sm:$0xff]
        %v417 = vld [vmem:[%s2] sm:$0xff]
        %v418 = vld [vmem:[%s2 + $0x8] sm:$0xff]
        %v419 = vld [vmem:[%s2 + $0x10] sm:$0xff]
        %v420 = vld [vmem:[%s2 + $0x18] sm:$0xff]
        %v421 = vld [vmem:[%s2 + $0x20] sm:$0xff]
        %v422 = vld [vmem:[%s2 + $0x28] sm:$0xff]
        %v423 = vld [vmem:[%s2 + $0x30] sm:$0xff]
        %v424 = vld [vmem:[%s2 + $0x38] sm:$0xff]
        %v425 = vld [vmem:[%s2 + $0x40] sm:$0xff]
        %v426 = vld [vmem:[%s2 + $0x48] sm:$0xff]
        %v427 = vld [vmem:[%s2 + $0x50] sm:$0xff]
        %v428 = vld [vmem:[%s2 + $0x58] sm:$0xff]
        %v429 = vld [vmem:[%s2 + $0x60] sm:$0xff]
        %v430 = vld [vmem:[%s2 + $0x68] sm:$0xff]
        %v431 = vld [vmem:[%s2 + $0x70] sm:$0xff]
        %v432 = vld [vmem:[%s2 + $0x78] sm:$0xff]
        %v433 = vld [vmem:[%s2 + $0x80] sm:$0xff]
        %v434 = vld [vmem:[%s2 + $0x88] sm:$0xff]
        %v435 = vld [vmem:[%s2 + $0x90] sm:$0xff]
        %v436 = vld [vmem:[%s2 + $0x98] sm:$0xff]
        %438 = vset.pattern.permute.xlu0 0
        %439 = vperm.xlu0 %438, %v417
        %v440 = vpop.permute.xlu0 %439
        %443 = vset.pattern.permute.xlu0 0
        %444 = vperm.xlu0 %443, %v418
        %v445 = vpop.permute.xlu0 %444
        %448 = vset.pattern.permute.xlu0 0
        %449 = vperm.xlu0 %448, %v419
        %v450 = vpop.permute.xlu0 %449
        %453 = vset.pattern.permute.xlu0 0
        %454 = vperm.xlu0 %453, %v420
        %v455 = vpop.permute.xlu0 %454
        %458 = vset.pattern.permute.xlu0 0
        %459 = vperm.xlu0 %458, %v421
        %v460 = vpop.permute.xlu0 %459
        %463 = vset.pattern.permute.xlu0 0
        %464 = vperm.xlu0 %463, %v422
        %v465 = vpop.permute.xlu0 %464
        %468 = vset.pattern.permute.xlu0 0
        %469 = vperm.xlu0 %468, %v423
        %v470 = vpop.permute.xlu0 %469
        %473 = vset.pattern.permute.xlu0 0
        %474 = vperm.xlu0 %473, %v424
        %v475 = vpop.permute.xlu0 %474
        %478 = vset.pattern.permute.xlu0 0
        %479 = vperm.xlu0 %478, %v425
        %v480 = vpop.permute.xlu0 %479
        %483 = vset.pattern.permute.xlu0 0
        %484 = vperm.xlu0 %483, %v426
        %v485 = vpop.permute.xlu0 %484
        %488 = vset.pattern.permute.xlu0 0
        %489 = vperm.xlu0 %488, %v427
        %v490 = vpop.permute.xlu0 %489
        %493 = vset.pattern.permute.xlu0 0
        %494 = vperm.xlu0 %493, %v428
        %v495 = vpop.permute.xlu0 %494
        %498 = vset.pattern.permute.xlu0 0
        %499 = vperm.xlu0 %498, %v429
        %v500 = vpop.permute.xlu0 %499
        %503 = vset.pattern.permute.xlu0 0
        %504 = vperm.xlu0 %503, %v430
        %v505 = vpop.permute.xlu0 %504
        %508 = vset.pattern.permute.xlu0 0
        %509 = vperm.xlu0 %508, %v431
        %v510 = vpop.permute.xlu0 %509
        %513 = vset.pattern.permute.xlu0 0
        %514 = vperm.xlu0 %513, %v432
        %v515 = vpop.permute.xlu0 %514
        %518 = vset.pattern.permute.xlu0 0
        %519 = vperm.xlu0 %518, %v433
        %v520 = vpop.permute.xlu0 %519
        %523 = vset.pattern.permute.xlu0 0
        %524 = vperm.xlu0 %523, %v434
        %v525 = vpop.permute.xlu0 %524
        %528 = vset.pattern.permute.xlu0 0
        %529 = vperm.xlu0 %528, %v435
        %v530 = vpop.permute.xlu0 %529
        %533 = vset.pattern.permute.xlu0 0
        %534 = vperm.xlu0 %533, %v436
        %v535 = vpop.permute.xlu0 %534
        %vm537 = vcmask 97280
        %v539 = vsel %vm537, %v397, 0
        %v542 = vsel %vm537, %v398, 0
        %v545 = vsel %vm537, %v399, 0
        %v548 = vsel %vm537, %v400, 0
        %v551 = vsel %vm537, %v401, 0
        %v554 = vsel %vm537, %v402, 0
        %v557 = vsel %vm537, %v403, 0
        %v560 = vsel %vm537, %v404, 0
        %v563 = vsel %vm537, %v405, 0
        %v566 = vsel %vm537, %v406, 0
        %v569 = vsel %vm537, %v407, 0
        %v572 = vsel %vm537, %v408, 0
        %v575 = vsel %vm537, %v409, 0
        %v578 = vsel %vm537, %v410, 0
        %v581 = vsel %vm537, %v411, 0
        %v584 = vsel %vm537, %v412, 0
        %v587 = vsel %vm537, %v413, 0
        %v590 = vsel %vm537, %v414, 0
        %v593 = vsel %vm537, %v415, 0
        %v596 = vsel %vm537, %v416, 0
        %vm598 = vcmask 1043456
        %v600 = vsel %vm598, %v396, 0
        %602 = vmatprep.subr.mxu0 0.0
        %603 = vmatpush1.msra.mxu0 0.0
        %604 = vmatprep.subr.mxu0 0.0
        %605 = vmatpush1.msra.mxu0 0.0
        %606 = vmatprep.subr.mxu0 0.0
        %607 = vmatpush1.msra.mxu0 0.0
        %608 = vmatprep.subr.mxu0 0.0
        %609 = vmatpush1.msra.mxu0 0.0
        %610 = vmatprep.subr.mxu0 0.0
        %611 = vmatpush1.msra.mxu0 0.0
        %612 = vmatprep.subr.mxu0 0.0
        %613 = vmatpush1.msra.mxu0 0.0
        %614 = vmatprep.subr.mxu0 0.0
        %615 = vmatpush1.msra.mxu0 0.0
        %616 = vmatprep.subr.mxu0 0.0
        %617 = vmatpush1.msra.mxu0 0.0
        %618 = vmatprep.subr.mxu0 0.0
        %619 = vmatpush1.msra.mxu0 0.0
        %620 = vmatprep.subr.mxu0 0.0
        %621 = vmatpush1.msra.mxu0 0.0
        %622 = vmatprep.subr.mxu0 0.0
        %623 = vmatpush1.msra.mxu0 0.0
        %624 = vmatprep.subr.mxu0 0.0
        %625 = vmatpush1.msra.mxu0 0.0
        %626 = vmatprep.subr.mxu0 0.0
        %627 = vmatpush1.msra.mxu0 0.0
        %628 = vmatprep.subr.mxu0 0.0
        %629 = vmatpush1.msra.mxu0 0.0
        %630 = vmatprep.subr.mxu0 0.0
        %631 = vmatpush1.msra.mxu0 %v600
        %632 = vmatprep.subr.mxu0 0.0
        %633 = vmatpush1.msra.mxu0 %v395
        %634 = vmatprep.subr.mxu0 0.0
        %635 = vmatpush2.msra.mxu0 0.0
        %636 = vmatprep.subr.mxu0 0.0
        %637 = vmatpush2.msra.mxu0 0.0
        %638 = vmatprep.subr.mxu0 0.0
        %639 = vmatpush2.msra.mxu0 0.0
        %640 = vmatprep.subr.mxu0 0.0
        %641 = vmatpush2.msra.mxu0 0.0
        %642 = vmatprep.subr.mxu0 0.0
        %643 = vmatpush2.msra.mxu0 0.0
        %644 = vmatprep.subr.mxu0 0.0
        %645 = vmatpush2.msra.mxu0 0.0
        %646 = vmatprep.subr.mxu0 0.0
        %647 = vmatpush2.msra.mxu0 0.0
        %648 = vmatprep.subr.mxu0 0.0
        %649 = vmatpush2.msra.mxu0 0.0
        %650 = vmatprep.subr.mxu0 0.0
        %651 = vmatpush2.msra.mxu0 0.0
        %652 = vmatprep.subr.mxu0 0.0
        %653 = vmatpush2.msra.mxu0 0.0
        %654 = vmatprep.subr.mxu0 0.0
        %655 = vmatpush2.msra.mxu0 0.0
        %656 = vmatprep.subr.mxu0 0.0
        %657 = vmatpush2.msra.mxu0 0.0
        %658 = vmatprep.subr.mxu0 0.0
        %659 = vmatpush2.msra.mxu0 0.0
        %660 = vmatprep.subr.mxu0 0.0
        %661 = vmatpush2.msra.mxu0 0.0
        %662 = vmatprep.subr.mxu0 0.0
        %663 = vmatpush2.msra.mxu0 0.0
        %664 = vmatprep.subr.mxu0 0.0
        %665 = vmatpush2.msra.mxu0 0.0
        %666 = vmatprep.mubr.f32.mxu0 0.0
        %667 = vmatmul.mubr.f32.gmra.mxu0 %v539
        %v668 = vpop.f32.mrf.mxu0
        %v669 = vadd.f32 %v440, %v668
        %v670 = vpop.f32.mrf.mxu0
        %671 = vmatprep.mubr.f32.mxu0 0.0
        %672 = vmatmul.mubr.f32.gmra.mxu0 %v542
        %v673 = vpop.f32.mrf.mxu0
        %v674 = vadd.f32 %v445, %v673
        %v675 = vpop.f32.mrf.mxu0
        %676 = vmatprep.mubr.f32.mxu0 0.0
        %677 = vmatmul.mubr.f32.gmra.mxu0 %v545
        %v678 = vpop.f32.mrf.mxu0
        %v679 = vadd.f32 %v450, %v678
        %v680 = vpop.f32.mrf.mxu0
        %681 = vmatprep.mubr.f32.mxu0 0.0
        %682 = vmatmul.mubr.f32.gmra.mxu0 %v548
        %v683 = vpop.f32.mrf.mxu0
        %v684 = vadd.f32 %v455, %v683
        %v685 = vpop.f32.mrf.mxu0
        %686 = vmatprep.mubr.f32.mxu0 0.0
        %687 = vmatmul.mubr.f32.gmra.mxu0 %v551
        %v688 = vpop.f32.mrf.mxu0
        %v689 = vadd.f32 %v460, %v688
        %v690 = vpop.f32.mrf.mxu0
        %691 = vmatprep.mubr.f32.mxu0 0.0
        %692 = vmatmul.mubr.f32.gmra.mxu0 %v554
        %v693 = vpop.f32.mrf.mxu0
        %v694 = vadd.f32 %v465, %v693
        %v695 = vpop.f32.mrf.mxu0
        %696 = vmatprep.mubr.f32.mxu0 0.0
        %697 = vmatmul.mubr.f32.gmra.mxu0 %v557
        %v698 = vpop.f32.mrf.mxu0
        %v699 = vadd.f32 %v470, %v698
        %v700 = vpop.f32.mrf.mxu0
        %701 = vmatprep.mubr.f32.mxu0 0.0
        %702 = vmatmul.mubr.f32.gmra.mxu0 %v560
        %v703 = vpop.f32.mrf.mxu0
        %v704 = vadd.f32 %v475, %v703
        %v705 = vpop.f32.mrf.mxu0
        %706 = vmatprep.mubr.f32.mxu0 0.0
        %707 = vmatmul.mubr.f32.gmra.mxu0 %v563
        %v708 = vpop.f32.mrf.mxu0
        %v709 = vadd.f32 %v480, %v708
        %v710 = vpop.f32.mrf.mxu0
        %711 = vmatprep.mubr.f32.mxu0 0.0
        %712 = vmatmul.mubr.f32.gmra.mxu0 %v566
        %v713 = vpop.f32.mrf.mxu0
        %v714 = vadd.f32 %v485, %v713
        %v715 = vpop.f32.mrf.mxu0
        %716 = vmatprep.mubr.f32.mxu0 0.0
        %717 = vmatmul.mubr.f32.gmra.mxu0 %v569
        %v718 = vpop.f32.mrf.mxu0
        %v719 = vadd.f32 %v490, %v718
        %v720 = vpop.f32.mrf.mxu0
        %721 = vmatprep.mubr.f32.mxu0 0.0
        %722 = vmatmul.mubr.f32.gmra.mxu0 %v572
        %v723 = vpop.f32.mrf.mxu0
        %v724 = vadd.f32 %v495, %v723
        %v725 = vpop.f32.mrf.mxu0
        %726 = vmatprep.mubr.f32.mxu0 0.0
        %727 = vmatmul.mubr.f32.gmra.mxu0 %v575
        %v728 = vpop.f32.mrf.mxu0
        %v729 = vadd.f32 %v500, %v728
        %v730 = vpop.f32.mrf.mxu0
        %731 = vmatprep.mubr.f32.mxu0 0.0
        %732 = vmatmul.mubr.f32.gmra.mxu0 %v578
        %v733 = vpop.f32.mrf.mxu0
        %v734 = vadd.f32 %v505, %v733
        %v735 = vpop.f32.mrf.mxu0
        %736 = vmatprep.mubr.f32.mxu0 0.0
        %737 = vmatmul.mubr.f32.gmra.mxu0 %v581
        %v738 = vpop.f32.mrf.mxu0
        %v739 = vadd.f32 %v510, %v738
        %v740 = vpop.f32.mrf.mxu0
        %741 = vmatprep.mubr.f32.mxu0 0.0
        %742 = vmatmul.mubr.f32.gmra.mxu0 %v584
        %v743 = vpop.f32.mrf.mxu0
        %v744 = vadd.f32 %v515, %v743
        %v745 = vpop.f32.mrf.mxu0
        %746 = vmatprep.mubr.f32.mxu0 0.0
        %747 = vmatmul.mubr.f32.gmra.mxu0 %v587
        %v748 = vpop.f32.mrf.mxu0
        %v749 = vadd.f32 %v520, %v748
        %v750 = vpop.f32.mrf.mxu0
        %751 = vmatprep.mubr.f32.mxu0 0.0
        %752 = vmatmul.mubr.f32.gmra.mxu0 %v590
        %v753 = vpop.f32.mrf.mxu0
        %v754 = vadd.f32 %v525, %v753
        %v755 = vpop.f32.mrf.mxu0
        %756 = vmatprep.mubr.f32.mxu0 0.0
        %757 = vmatmul.mubr.f32.gmra.mxu0 %v593
        %v758 = vpop.f32.mrf.mxu0
        %v759 = vadd.f32 %v530, %v758
        %v760 = vpop.f32.mrf.mxu0
        %761 = vmatprep.mubr.f32.mxu0 0.0
        %762 = vmatmul.mubr.f32.gmra.mxu0 %v596
        %v763 = vpop.f32.mrf.mxu0
        %v764 = vadd.f32 %v535, %v763
        %v765 = vpop.f32.mrf.mxu0
        %766 = vdwg.mxu0
        %v767 = vmul.f32 %v669, 0.01
        %v768 = vmul.f32 %v674, 0.01
        %v769 = vmul.f32 %v679, 0.01
        %v770 = vmul.f32 %v684, 0.01
        %v771 = vmul.f32 %v689, 0.01
        %v772 = vmul.f32 %v694, 0.01
        %v773 = vmul.f32 %v699, 0.01
        %v774 = vmul.f32 %v704, 0.01
        %v775 = vmul.f32 %v709, 0.01
        %v776 = vmul.f32 %v714, 0.01
        %v777 = vmul.f32 %v719, 0.01
        %v778 = vmul.f32 %v724, 0.01
        %v779 = vmul.f32 %v729, 0.01
        %v780 = vmul.f32 %v734, 0.01
        %v781 = vmul.f32 %v739, 0.01
        %v782 = vmul.f32 %v744, 0.01
        %v783 = vmul.f32 %v749, 0.01
        %v784 = vmul.f32 %v754, 0.01
        %v785 = vmul.f32 %v759, 0.01
        %v786 = vmul.f32 %v764, 0.01
        %v787 = vmax.f32 %v669, %v767
        %v788 = vmax.f32 %v674, %v768
        %v789 = vmax.f32 %v679, %v769
        %v790 = vmax.f32 %v684, %v770
        %v791 = vmax.f32 %v689, %v771
        %v792 = vmax.f32 %v694, %v772
        %v793 = vmax.f32 %v699, %v773
        %v794 = vmax.f32 %v704, %v774
        %v795 = vmax.f32 %v709, %v775
        %v796 = vmax.f32 %v714, %v776
        %v797 = vmax.f32 %v719, %v777
        %v798 = vmax.f32 %v724, %v778
        %v799 = vmax.f32 %v729, %v779
        %v800 = vmax.f32 %v734, %v780
        %v801 = vmax.f32 %v739, %v781
        %v802 = vmax.f32 %v744, %v782
        %v803 = vmax.f32 %v749, %v783
        %v804 = vmax.f32 %v754, %v784
        %v805 = vmax.f32 %v759, %v785
        %v806 = vmax.f32 %v764, %v786
        %v807 = vld [vmem:[%s3] sm:$0xff]
        %v808 = vld [vmem:[%s3 + $0x8] sm:$0xff]
        %v809 = vld [vmem:[%s3 + $0x10] sm:$0xff]
        %v810 = vld [vmem:[%s3 + $0x18] sm:$0xff]
        %v811 = vld [vmem:[%s3 + $0x20] sm:$0xff]
        %v812 = vld [vmem:[%s3 + $0x28] sm:$0xff]
        %v813 = vld [vmem:[%s3 + $0x30] sm:$0xff]
        %v814 = vld [vmem:[%s3 + $0x38] sm:$0xff]
        %v815 = vld [vmem:[%s3 + $0x40] sm:$0xff]
        %v816 = vld [vmem:[%s3 + $0x48] sm:$0xff]
        %v817 = vld [vmem:[%s3 + $0x50] sm:$0xff]
        %v818 = vld [vmem:[%s3 + $0x58] sm:$0xff]
        %v819 = vld [vmem:[%s3 + $0x60] sm:$0xff]
        %v820 = vld [vmem:[%s3 + $0x68] sm:$0xff]
        %v821 = vld [vmem:[%s3 + $0x70] sm:$0xff]
        %v822 = vld [vmem:[%s3 + $0x78] sm:$0xff]
        %v823 = vld [vmem:[%s3 + $0x80] sm:$0xff]
        %v824 = vld [vmem:[%s3 + $0x88] sm:$0xff]
        %v825 = vld [vmem:[%s3 + $0x90] sm:$0xff]
        %v826 = vld [vmem:[%s3 + $0x98] sm:$0xff]
        %v827 = vld [vmem:[%s3 + $0xa0] sm:$0xff]
        %v828 = vld [vmem:[%s3 + $0xa8] sm:$0xff]
        %v829 = vld [vmem:[%s3 + $0xb0] sm:$0xff]
        %v830 = vld [vmem:[%s3 + $0xb8] sm:$0xff]
        %v831 = vld [vmem:[%s3 + $0xc0] sm:$0xff]
        %v832 = vld [vmem:[%s3 + $0xc8] sm:$0xff]
        %v833 = vld [vmem:[%s3 + $0xd0] sm:$0xff]
        %v834 = vld [vmem:[%s3 + $0xd8] sm:$0xff]
        %v835 = vld [vmem:[%s3 + $0xe0] sm:$0xff]
        %v836 = vld [vmem:[%s3 + $0xe8] sm:$0xff]
        %v837 = vld [vmem:[%s3 + $0xf0] sm:$0xff]
        %v838 = vld [vmem:[%s3 + $0xf8] sm:$0xff]
        %v839 = vld [vmem:[%s3 + $0x100] sm:$0xff]
        %v840 = vld [vmem:[%s3 + $0x108] sm:$0xff]
        %v841 = vld [vmem:[%s3 + $0x110] sm:$0xff]
        %v842 = vld [vmem:[%s3 + $0x118] sm:$0xff]
        %v843 = vld [vmem:[%s3 + $0x120] sm:$0xff]
        %v844 = vld [vmem:[%s3 + $0x128] sm:$0xff]
        %v845 = vld [vmem:[%s3 + $0x130] sm:$0xff]
        %v846 = vld [vmem:[%s3 + $0x138] sm:$0xff]
        %v847 = vld [vmem:[%s4] sm:$0xff]
        %v848 = vld [vmem:[%s4 + $0x8] sm:$0xff]
        %v849 = vld [vmem:[%s4 + $0x10] sm:$0xff]
        %v850 = vld [vmem:[%s4 + $0x18] sm:$0xff]
        %v851 = vld [vmem:[%s4 + $0x20] sm:$0xff]
        %v852 = vld [vmem:[%s4 + $0x28] sm:$0xff]
        %v853 = vld [vmem:[%s4 + $0x30] sm:$0xff]
        %v854 = vld [vmem:[%s4 + $0x38] sm:$0xff]
        %v855 = vld [vmem:[%s4 + $0x40] sm:$0xff]
        %v856 = vld [vmem:[%s4 + $0x48] sm:$0xff]
        %v857 = vld [vmem:[%s4 + $0x50] sm:$0xff]
        %v858 = vld [vmem:[%s4 + $0x58] sm:$0xff]
        %v859 = vld [vmem:[%s4 + $0x60] sm:$0xff]
        %v860 = vld [vmem:[%s4 + $0x68] sm:$0xff]
        %v861 = vld [vmem:[%s4 + $0x70] sm:$0xff]
        %v862 = vld [vmem:[%s4 + $0x78] sm:$0xff]
        %v863 = vld [vmem:[%s4 + $0x80] sm:$0xff]
        %v864 = vld [vmem:[%s4 + $0x88] sm:$0xff]
        %v865 = vld [vmem:[%s4 + $0x90] sm:$0xff]
        %v866 = vld [vmem:[%s4 + $0x98] sm:$0xff]
        %868 = vset.pattern.permute.xlu0 0
        %869 = vperm.xlu0 %868, %v847
        %v870 = vpop.permute.xlu0 %869
        %873 = vset.pattern.permute.xlu0 0
        %874 = vperm.xlu0 %873, %v848
        %v875 = vpop.permute.xlu0 %874
        %878 = vset.pattern.permute.xlu0 0
        %879 = vperm.xlu0 %878, %v849
        %v880 = vpop.permute.xlu0 %879
        %883 = vset.pattern.permute.xlu0 0
        %884 = vperm.xlu0 %883, %v850
        %v885 = vpop.permute.xlu0 %884
        %888 = vset.pattern.permute.xlu0 0
        %889 = vperm.xlu0 %888, %v851
        %v890 = vpop.permute.xlu0 %889
        %893 = vset.pattern.permute.xlu0 0
        %894 = vperm.xlu0 %893, %v852
        %v895 = vpop.permute.xlu0 %894
        %898 = vset.pattern.permute.xlu0 0
        %899 = vperm.xlu0 %898, %v853
        %v900 = vpop.permute.xlu0 %899
        %903 = vset.pattern.permute.xlu0 0
        %904 = vperm.xlu0 %903, %v854
        %v905 = vpop.permute.xlu0 %904
        %908 = vset.pattern.permute.xlu0 0
        %909 = vperm.xlu0 %908, %v855
        %v910 = vpop.permute.xlu0 %909
        %913 = vset.pattern.permute.xlu0 0
        %914 = vperm.xlu0 %913, %v856
        %v915 = vpop.permute.xlu0 %914
        %918 = vset.pattern.permute.xlu0 0
        %919 = vperm.xlu0 %918, %v857
        %v920 = vpop.permute.xlu0 %919
        %923 = vset.pattern.permute.xlu0 0
        %924 = vperm.xlu0 %923, %v858
        %v925 = vpop.permute.xlu0 %924
        %928 = vset.pattern.permute.xlu0 0
        %929 = vperm.xlu0 %928, %v859
        %v930 = vpop.permute.xlu0 %929
        %933 = vset.pattern.permute.xlu0 0
        %934 = vperm.xlu0 %933, %v860
        %v935 = vpop.permute.xlu0 %934
        %938 = vset.pattern.permute.xlu0 0
        %939 = vperm.xlu0 %938, %v861
        %v940 = vpop.permute.xlu0 %939
        %943 = vset.pattern.permute.xlu0 0
        %944 = vperm.xlu0 %943, %v862
        %v945 = vpop.permute.xlu0 %944
        %948 = vset.pattern.permute.xlu0 0
        %949 = vperm.xlu0 %948, %v863
        %v950 = vpop.permute.xlu0 %949
        %953 = vset.pattern.permute.xlu0 0
        %954 = vperm.xlu0 %953, %v864
        %v955 = vpop.permute.xlu0 %954
        %958 = vset.pattern.permute.xlu0 0
        %959 = vperm.xlu0 %958, %v865
        %v960 = vpop.permute.xlu0 %959
        %963 = vset.pattern.permute.xlu0 0
        %964 = vperm.xlu0 %963, %v866
        %v965 = vpop.permute.xlu0 %964
        %vm967 = vcmask 261120
        %v969 = vsel %vm967, %v808, 0
        %v972 = vsel %vm967, %v810, 0
        %v975 = vsel %vm967, %v812, 0
        %v978 = vsel %vm967, %v814, 0
        %v981 = vsel %vm967, %v816, 0
        %v984 = vsel %vm967, %v818, 0
        %v987 = vsel %vm967, %v820, 0
        %v990 = vsel %vm967, %v822, 0
        %v993 = vsel %vm967, %v824, 0
        %v996 = vsel %vm967, %v826, 0
        %v999 = vsel %vm967, %v828, 0
        %v1002 = vsel %vm967, %v830, 0
        %v1005 = vsel %vm967, %v832, 0
        %v1008 = vsel %vm967, %v834, 0
        %v1011 = vsel %vm967, %v836, 0
        %v1014 = vsel %vm967, %v838, 0
        %v1017 = vsel %vm967, %v840, 0
        %v1020 = vsel %vm967, %v842, 0
        %v1023 = vsel %vm967, %v844, 0
        %v1026 = vsel %vm967, %v846, 0
        %1028 = vmatprep.subr.mxu0 0.0
        %1029 = vmatpush1.msra.mxu0 %v802
        %1030 = vmatprep.subr.mxu0 0.0
        %1031 = vmatpush1.msra.mxu0 %v801
        %1032 = vmatprep.subr.mxu0 0.0
        %1033 = vmatpush1.msra.mxu0 %v800
        %1034 = vmatprep.subr.mxu0 0.0
        %1035 = vmatpush1.msra.mxu0 %v799
        %1036 = vmatprep.subr.mxu0 0.0
        %1037 = vmatpush1.msra.mxu0 %v798
        %1038 = vmatprep.subr.mxu0 0.0
        %1039 = vmatpush1.msra.mxu0 %v797
        %1040 = vmatprep.subr.mxu0 0.0
        %1041 = vmatpush1.msra.mxu0 %v796
        %1042 = vmatprep.subr.mxu0 0.0
        %1043 = vmatpush1.msra.mxu0 %v795
        %1044 = vmatprep.subr.mxu0 0.0
        %1045 = vmatpush1.msra.mxu0 %v794
        %1046 = vmatprep.subr.mxu0 0.0
        %1047 = vmatpush1.msra.mxu0 %v793
        %1048 = vmatprep.subr.mxu0 0.0
        %1049 = vmatpush1.msra.mxu0 %v792
        %1050 = vmatprep.subr.mxu0 0.0
        %1051 = vmatpush1.msra.mxu0 %v791
        %1052 = vmatprep.subr.mxu0 0.0
        %1053 = vmatpush1.msra.mxu0 %v790
        %1054 = vmatprep.subr.mxu0 0.0
        %1055 = vmatpush1.msra.mxu0 %v789
        %1056 = vmatprep.subr.mxu0 0.0
        %1057 = vmatpush1.msra.mxu0 %v788
        %1058 = vmatprep.subr.mxu0 0.0
        %1059 = vmatpush1.msra.mxu0 %v787
        %1060 = vmatprep.subr.mxu0 0.0
        %1061 = vmatpush2.msra.mxu0 0.0
        %1062 = vmatprep.subr.mxu0 0.0
        %1063 = vmatpush2.msra.mxu0 0.0
        %1064 = vmatprep.subr.mxu0 0.0
        %1065 = vmatpush2.msra.mxu0 0.0
        %1066 = vmatprep.subr.mxu0 0.0
        %1067 = vmatpush2.msra.mxu0 0.0
        %1068 = vmatprep.subr.mxu0 0.0
        %1069 = vmatpush2.msra.mxu0 0.0
        %1070 = vmatprep.subr.mxu0 0.0
        %1071 = vmatpush2.msra.mxu0 0.0
        %1072 = vmatprep.subr.mxu0 0.0
        %1073 = vmatpush2.msra.mxu0 0.0
        %1074 = vmatprep.subr.mxu0 0.0
        %1075 = vmatpush2.msra.mxu0 0.0
        %1076 = vmatprep.subr.mxu0 0.0
        %1077 = vmatpush2.msra.mxu0 0.0
        %1078 = vmatprep.subr.mxu0 0.0
        %1079 = vmatpush2.msra.mxu0 0.0
        %1080 = vmatprep.subr.mxu0 0.0
        %1081 = vmatpush2.msra.mxu0 0.0
        %1082 = vmatprep.subr.mxu0 0.0
        %1083 = vmatpush2.msra.mxu0 0.0
        %1084 = vmatprep.subr.mxu0 0.0
        %1085 = vmatpush2.msra.mxu0 %v806
        %1086 = vmatprep.subr.mxu0 0.0
        %1087 = vmatpush2.msra.mxu0 %v805
        %1088 = vmatprep.subr.mxu0 0.0
        %1089 = vmatpush2.msra.mxu0 %v804
        %1090 = vmatprep.subr.mxu0 0.0
        %1091 = vmatpush2.msra.mxu0 %v803
        %1092 = vmatprep.mubr.f32.mxu0 %v969
        %1093 = vmatmul.mubr.f32.gmra.mxu0 %v807
        %v1094 = vpop.f32.mrf.mxu0
        %v1095 = vadd.f32 %v870, %v1094
        %v1096 = vpop.f32.mrf.mxu0
        %1097 = vmatprep.mubr.f32.mxu0 %v972
        %1098 = vmatmul.mubr.f32.gmra.mxu0 %v809
        %v1099 = vpop.f32.mrf.mxu0
        %v1100 = vadd.f32 %v875, %v1099
        %v1101 = vpop.f32.mrf.mxu0
        %1102 = vmatprep.mubr.f32.mxu0 %v975
        %1103 = vmatmul.mubr.f32.gmra.mxu0 %v811
        %v1104 = vpop.f32.mrf.mxu0
        %v1105 = vadd.f32 %v880, %v1104
        %v1106 = vpop.f32.mrf.mxu0
        %1107 = vmatprep.mubr.f32.mxu0 %v978
        %1108 = vmatmul.mubr.f32.gmra.mxu0 %v813
        %v1109 = vpop.f32.mrf.mxu0
        %v1110 = vadd.f32 %v885, %v1109
        %v1111 = vpop.f32.mrf.mxu0
        %1112 = vmatprep.mubr.f32.mxu0 %v981
        %1113 = vmatmul.mubr.f32.gmra.mxu0 %v815
        %v1114 = vpop.f32.mrf.mxu0
        %v1115 = vadd.f32 %v890, %v1114
        %v1116 = vpop.f32.mrf.mxu0
        %1117 = vmatprep.mubr.f32.mxu0 %v984
        %1118 = vmatmul.mubr.f32.gmra.mxu0 %v817
        %v1119 = vpop.f32.mrf.mxu0
        %v1120 = vadd.f32 %v895, %v1119
        %v1121 = vpop.f32.mrf.mxu0
        %1122 = vmatprep.mubr.f32.mxu0 %v987
        %1123 = vmatmul.mubr.f32.gmra.mxu0 %v819
        %v1124 = vpop.f32.mrf.mxu0
        %v1125 = vadd.f32 %v900, %v1124
        %v1126 = vpop.f32.mrf.mxu0
        %1127 = vmatprep.mubr.f32.mxu0 %v990
        %1128 = vmatmul.mubr.f32.gmra.mxu0 %v821
        %v1129 = vpop.f32.mrf.mxu0
        %v1130 = vadd.f32 %v905, %v1129
        %v1131 = vpop.f32.mrf.mxu0
        %1132 = vmatprep.mubr.f32.mxu0 %v993
        %1133 = vmatmul.mubr.f32.gmra.mxu0 %v823
        %v1134 = vpop.f32.mrf.mxu0
        %v1135 = vadd.f32 %v910, %v1134
        %v1136 = vpop.f32.mrf.mxu0
        %1137 = vmatprep.mubr.f32.mxu0 %v996
        %1138 = vmatmul.mubr.f32.gmra.mxu0 %v825
        %v1139 = vpop.f32.mrf.mxu0
        %v1140 = vadd.f32 %v915, %v1139
        %v1141 = vpop.f32.mrf.mxu0
        %1142 = vmatprep.mubr.f32.mxu0 %v999
        %1143 = vmatmul.mubr.f32.gmra.mxu0 %v827
        %v1144 = vpop.f32.mrf.mxu0
        %v1145 = vadd.f32 %v920, %v1144
        %v1146 = vpop.f32.mrf.mxu0
        %1147 = vmatprep.mubr.f32.mxu0 %v1002
        %1148 = vmatmul.mubr.f32.gmra.mxu0 %v829
        %v1149 = vpop.f32.mrf.mxu0
        %v1150 = vadd.f32 %v925, %v1149
        %v1151 = vpop.f32.mrf.mxu0
        %1152 = vmatprep.mubr.f32.mxu0 %v1005
        %1153 = vmatmul.mubr.f32.gmra.mxu0 %v831
        %v1154 = vpop.f32.mrf.mxu0
        %v1155 = vadd.f32 %v930, %v1154
        %v1156 = vpop.f32.mrf.mxu0
        %1157 = vmatprep.mubr.f32.mxu0 %v1008
        %1158 = vmatmul.mubr.f32.gmra.mxu0 %v833
        %v1159 = vpop.f32.mrf.mxu0
        %v1160 = vadd.f32 %v935, %v1159
        %v1161 = vpop.f32.mrf.mxu0
        %1162 = vmatprep.mubr.f32.mxu0 %v1011
        %1163 = vmatmul.mubr.f32.gmra.mxu0 %v835
        %v1164 = vpop.f32.mrf.mxu0
        %v1165 = vadd.f32 %v940, %v1164
        %v1166 = vpop.f32.mrf.mxu0
        %1167 = vmatprep.mubr.f32.mxu0 %v1014
        %1168 = vmatmul.mubr.f32.gmra.mxu0 %v837
        %v1169 = vpop.f32.mrf.mxu0
        %v1170 = vadd.f32 %v945, %v1169
        %v1171 = vpop.f32.mrf.mxu0
        %1172 = vmatprep.mubr.f32.mxu0 %v1017
        %1173 = vmatmul.mubr.f32.gmra.mxu0 %v839
        %v1174 = vpop.f32.mrf.mxu0
        %v1175 = vadd.f32 %v950, %v1174
        %v1176 = vpop.f32.mrf.mxu0
        %1177 = vmatprep.mubr.f32.mxu0 %v1020
        %1178 = vmatmul.mubr.f32.gmra.mxu0 %v841
        %v1179 = vpop.f32.mrf.mxu0
        %v1180 = vadd.f32 %v955, %v1179
        %v1181 = vpop.f32.mrf.mxu0
        %1182 = vmatprep.mubr.f32.mxu0 %v1023
        %1183 = vmatmul.mubr.f32.gmra.mxu0 %v843
        %v1184 = vpop.f32.mrf.mxu0
        %v1185 = vadd.f32 %v960, %v1184
        %v1186 = vpop.f32.mrf.mxu0
        %1187 = vmatprep.mubr.f32.mxu0 %v1026
        %1188 = vmatmul.mubr.f32.gmra.mxu0 %v845
        %v1189 = vpop.f32.mrf.mxu0
        %v1190 = vadd.f32 %v965, %v1189
        %v1191 = vpop.f32.mrf.mxu0
        %1192 = vdwg.mxu0
        %v1193 = vmul.f32 %v1095, 0.01
        %v1194 = vmul.f32 %v1100, 0.01
        %v1195 = vmul.f32 %v1105, 0.01
        %v1196 = vmul.f32 %v1110, 0.01
        %v1197 = vmul.f32 %v1115, 0.01
        %v1198 = vmul.f32 %v1120, 0.01
        %v1199 = vmul.f32 %v1125, 0.01
        %v1200 = vmul.f32 %v1130, 0.01
        %v1201 = vmul.f32 %v1135, 0.01
        %v1202 = vmul.f32 %v1140, 0.01
        %v1203 = vmul.f32 %v1145, 0.01
        %v1204 = vmul.f32 %v1150, 0.01
        %v1205 = vmul.f32 %v1155, 0.01
        %v1206 = vmul.f32 %v1160, 0.01
        %v1207 = vmul.f32 %v1165, 0.01
        %v1208 = vmul.f32 %v1170, 0.01
        %v1209 = vmul.f32 %v1175, 0.01
        %v1210 = vmul.f32 %v1180, 0.01
        %v1211 = vmul.f32 %v1185, 0.01
        %v1212 = vmul.f32 %v1190, 0.01
        %v1213 = vmax.f32 %v1095, %v1193
        %v1214 = vmax.f32 %v1100, %v1194
        %v1215 = vmax.f32 %v1105, %v1195
        %v1216 = vmax.f32 %v1110, %v1196
        %v1217 = vmax.f32 %v1115, %v1197
        %v1218 = vmax.f32 %v1120, %v1198
        %v1219 = vmax.f32 %v1125, %v1199
        %v1220 = vmax.f32 %v1130, %v1200
        %v1221 = vmax.f32 %v1135, %v1201
        %v1222 = vmax.f32 %v1140, %v1202
        %v1223 = vmax.f32 %v1145, %v1203
        %v1224 = vmax.f32 %v1150, %v1204
        %v1225 = vmax.f32 %v1155, %v1205
        %v1226 = vmax.f32 %v1160, %v1206
        %v1227 = vmax.f32 %v1165, %v1207
        %v1228 = vmax.f32 %v1170, %v1208
        %v1229 = vmax.f32 %v1175, %v1209
        %v1230 = vmax.f32 %v1180, %v1210
        %v1231 = vmax.f32 %v1185, %v1211
        %v1232 = vmax.f32 %v1190, %v1212
        %v1233 = vld [vmem:[%s5] sm:$0xff]
        %v1234 = vld [vmem:[%s5 + $0x8] sm:$0xff]
        %v1235 = vld [vmem:[%s5 + $0x10] sm:$0xff]
        %v1236 = vld [vmem:[%s5 + $0x18] sm:$0xff]
        %v1237 = vld [vmem:[%s5 + $0x20] sm:$0xff]
        %v1238 = vld [vmem:[%s5 + $0x28] sm:$0xff]
        %v1239 = vld [vmem:[%s5 + $0x30] sm:$0xff]
        %v1240 = vld [vmem:[%s5 + $0x38] sm:$0xff]
        %v1241 = vld [vmem:[%s5 + $0x40] sm:$0xff]
        %v1242 = vld [vmem:[%s5 + $0x48] sm:$0xff]
        %v1243 = vld [vmem:[%s5 + $0x50] sm:$0xff]
        %v1244 = vld [vmem:[%s5 + $0x58] sm:$0xff]
        %v1245 = vld [vmem:[%s5 + $0x60] sm:$0xff]
        %v1246 = vld [vmem:[%s5 + $0x68] sm:$0xff]
        %v1247 = vld [vmem:[%s5 + $0x70] sm:$0xff]
        %v1248 = vld [vmem:[%s5 + $0x78] sm:$0xff]
        %v1249 = vld [vmem:[%s5 + $0x80] sm:$0xff]
        %v1250 = vld [vmem:[%s5 + $0x88] sm:$0xff]
        %v1251 = vld [vmem:[%s5 + $0x90] sm:$0xff]
        %v1252 = vld [vmem:[%s5 + $0x98] sm:$0xff]
        %v1253 = vld [vmem:[%s6] sm:$0xff]
        %v1254 = vld [vmem:[%s6 + $0x8] sm:$0xff]
        %v1255 = vld [vmem:[%s6 + $0x10] sm:$0xff]
        %v1256 = vld [vmem:[%s6 + $0x18] sm:$0xff]
        %v1257 = vld [vmem:[%s6 + $0x20] sm:$0xff]
        %v1258 = vld [vmem:[%s6 + $0x28] sm:$0xff]
        %v1259 = vld [vmem:[%s6 + $0x30] sm:$0xff]
        %v1260 = vld [vmem:[%s6 + $0x38] sm:$0xff]
        %v1261 = vld [vmem:[%s6 + $0x40] sm:$0xff]
        %v1262 = vld [vmem:[%s6 + $0x48] sm:$0xff]
        %1264 = vset.pattern.permute.xlu0 0
        %1265 = vperm.xlu0 %1264, %v1253
        %v1266 = vpop.permute.xlu0 %1265
        %1269 = vset.pattern.permute.xlu0 0
        %1270 = vperm.xlu0 %1269, %v1254
        %v1271 = vpop.permute.xlu0 %1270
        %1274 = vset.pattern.permute.xlu0 0
        %1275 = vperm.xlu0 %1274, %v1255
        %v1276 = vpop.permute.xlu0 %1275
        %1279 = vset.pattern.permute.xlu0 0
        %1280 = vperm.xlu0 %1279, %v1256
        %v1281 = vpop.permute.xlu0 %1280
        %1284 = vset.pattern.permute.xlu0 0
        %1285 = vperm.xlu0 %1284, %v1257
        %v1286 = vpop.permute.xlu0 %1285
        %1289 = vset.pattern.permute.xlu0 0
        %1290 = vperm.xlu0 %1289, %v1258
        %v1291 = vpop.permute.xlu0 %1290
        %1294 = vset.pattern.permute.xlu0 0
        %1295 = vperm.xlu0 %1294, %v1259
        %v1296 = vpop.permute.xlu0 %1295
        %1299 = vset.pattern.permute.xlu0 0
        %1300 = vperm.xlu0 %1299, %v1260
        %v1301 = vpop.permute.xlu0 %1300
        %1304 = vset.pattern.permute.xlu0 0
        %1305 = vperm.xlu0 %1304, %v1261
        %v1306 = vpop.permute.xlu0 %1305
        %1309 = vset.pattern.permute.xlu0 0
        %1310 = vperm.xlu0 %1309, %v1262
        %v1311 = vpop.permute.xlu0 %1310
        %v1314 = vsel %vm967, %v1234, 0
        %v1317 = vsel %vm967, %v1236, 0
        %v1320 = vsel %vm967, %v1238, 0
        %v1323 = vsel %vm967, %v1240, 0
        %v1326 = vsel %vm967, %v1242, 0
        %v1329 = vsel %vm967, %v1244, 0
        %v1332 = vsel %vm967, %v1246, 0
        %v1335 = vsel %vm967, %v1248, 0
        %v1338 = vsel %vm967, %v1250, 0
        %v1341 = vsel %vm967, %v1252, 0
        %1343 = vmatprep.subr.mxu0 0.0
        %1344 = vmatpush1.msra.mxu0 %v1228
        %1345 = vmatprep.subr.mxu0 0.0
        %1346 = vmatpush1.msra.mxu0 %v1227
        %1347 = vmatprep.subr.mxu0 0.0
        %1348 = vmatpush1.msra.mxu0 %v1226
        %1349 = vmatprep.subr.mxu0 0.0
        %1350 = vmatpush1.msra.mxu0 %v1225
        %1351 = vmatprep.subr.mxu0 0.0
        %1352 = vmatpush1.msra.mxu0 %v1224
        %1353 = vmatprep.subr.mxu0 0.0
        %1354 = vmatpush1.msra.mxu0 %v1223
        %1355 = vmatprep.subr.mxu0 0.0
        %1356 = vmatpush1.msra.mxu0 %v1222
        %1357 = vmatprep.subr.mxu0 0.0
        %1358 = vmatpush1.msra.mxu0 %v1221
        %1359 = vmatprep.subr.mxu0 0.0
        %1360 = vmatpush1.msra.mxu0 %v1220
        %1361 = vmatprep.subr.mxu0 0.0
        %1362 = vmatpush1.msra.mxu0 %v1219
        %1363 = vmatprep.subr.mxu0 0.0
        %1364 = vmatpush1.msra.mxu0 %v1218
        %1365 = vmatprep.subr.mxu0 0.0
        %1366 = vmatpush1.msra.mxu0 %v1217
        %1367 = vmatprep.subr.mxu0 0.0
        %1368 = vmatpush1.msra.mxu0 %v1216
        %1369 = vmatprep.subr.mxu0 0.0
        %1370 = vmatpush1.msra.mxu0 %v1215
        %1371 = vmatprep.subr.mxu0 0.0
        %1372 = vmatpush1.msra.mxu0 %v1214
        %1373 = vmatprep.subr.mxu0 0.0
        %1374 = vmatpush1.msra.mxu0 %v1213
        %1375 = vmatprep.subr.mxu0 0.0
        %1376 = vmatpush2.msra.mxu0 0.0
        %1377 = vmatprep.subr.mxu0 0.0
        %1378 = vmatpush2.msra.mxu0 0.0
        %1379 = vmatprep.subr.mxu0 0.0
        %1380 = vmatpush2.msra.mxu0 0.0
        %1381 = vmatprep.subr.mxu0 0.0
        %1382 = vmatpush2.msra.mxu0 0.0
        %1383 = vmatprep.subr.mxu0 0.0
        %1384 = vmatpush2.msra.mxu0 0.0
        %1385 = vmatprep.subr.mxu0 0.0
        %1386 = vmatpush2.msra.mxu0 0.0
        %1387 = vmatprep.subr.mxu0 0.0
        %1388 = vmatpush2.msra.mxu0 0.0
        %1389 = vmatprep.subr.mxu0 0.0
        %1390 = vmatpush2.msra.mxu0 0.0
        %1391 = vmatprep.subr.mxu0 0.0
        %1392 = vmatpush2.msra.mxu0 0.0
        %1393 = vmatprep.subr.mxu0 0.0
        %1394 = vmatpush2.msra.mxu0 0.0
        %1395 = vmatprep.subr.mxu0 0.0
        %1396 = vmatpush2.msra.mxu0 0.0
        %1397 = vmatprep.subr.mxu0 0.0
        %1398 = vmatpush2.msra.mxu0 0.0
        %1399 = vmatprep.subr.mxu0 0.0
        %1400 = vmatpush2.msra.mxu0 %v1232
        %1401 = vmatprep.subr.mxu0 0.0
        %1402 = vmatpush2.msra.mxu0 %v1231
        %1403 = vmatprep.subr.mxu0 0.0
        %1404 = vmatpush2.msra.mxu0 %v1230
        %1405 = vmatprep.subr.mxu0 0.0
        %1406 = vmatpush2.msra.mxu0 %v1229
        %1407 = vmatprep.mubr.f32.mxu0 %v1314
        %1408 = vmatmul.mubr.f32.gmra.mxu0 %v1233
        %v1409 = vpop.f32.mrf.mxu0
        %v1410 = vadd.f32 %v1266, %v1409
        %v1411 = vpop.f32.mrf.mxu0
        %1412 = vmatprep.mubr.f32.mxu0 %v1317
        %1413 = vmatmul.mubr.f32.gmra.mxu0 %v1235
        %v1414 = vpop.f32.mrf.mxu0
        %v1415 = vadd.f32 %v1271, %v1414
        %v1416 = vpop.f32.mrf.mxu0
        %1417 = vmatprep.mubr.f32.mxu0 %v1320
        %1418 = vmatmul.mubr.f32.gmra.mxu0 %v1237
        %v1419 = vpop.f32.mrf.mxu0
        %v1420 = vadd.f32 %v1276, %v1419
        %v1421 = vpop.f32.mrf.mxu0
        %1422 = vmatprep.mubr.f32.mxu0 %v1323
        %1423 = vmatmul.mubr.f32.gmra.mxu0 %v1239
        %v1424 = vpop.f32.mrf.mxu0
        %v1425 = vadd.f32 %v1281, %v1424
        %v1426 = vpop.f32.mrf.mxu0
        %1427 = vmatprep.mubr.f32.mxu0 %v1326
        %1428 = vmatmul.mubr.f32.gmra.mxu0 %v1241
        %v1429 = vpop.f32.mrf.mxu0
        %v1430 = vadd.f32 %v1286, %v1429
        %v1431 = vpop.f32.mrf.mxu0
        %1432 = vmatprep.mubr.f32.mxu0 %v1329
        %1433 = vmatmul.mubr.f32.gmra.mxu0 %v1243
        %v1434 = vpop.f32.mrf.mxu0
        %v1435 = vadd.f32 %v1291, %v1434
        %v1436 = vpop.f32.mrf.mxu0
        %1437 = vmatprep.mubr.f32.mxu0 %v1332
        %1438 = vmatmul.mubr.f32.gmra.mxu0 %v1245
        %v1439 = vpop.f32.mrf.mxu0
        %v1440 = vadd.f32 %v1296, %v1439
        %v1441 = vpop.f32.mrf.mxu0
        %1442 = vmatprep.mubr.f32.mxu0 %v1335
        %1443 = vmatmul.mubr.f32.gmra.mxu0 %v1247
        %v1444 = vpop.f32.mrf.mxu0
        %v1445 = vadd.f32 %v1301, %v1444
        %v1446 = vpop.f32.mrf.mxu0
        %1447 = vmatprep.mubr.f32.mxu0 %v1338
        %1448 = vmatmul.mubr.f32.gmra.mxu0 %v1249
        %v1449 = vpop.f32.mrf.mxu0
        %v1450 = vadd.f32 %v1306, %v1449
        %v1451 = vpop.f32.mrf.mxu0
        %1452 = vmatprep.mubr.f32.mxu0 %v1341
        %1453 = vmatmul.mubr.f32.gmra.mxu0 %v1251
        %v1454 = vpop.f32.mrf.mxu0
        %v1455 = vadd.f32 %v1311, %v1454
        %v1456 = vpop.f32.mrf.mxu0
        %1457 = vdwg.mxu0
        %v1458 = vmul.f32 %v1410, 0.01
        %v1459 = vmul.f32 %v1415, 0.01
        %v1460 = vmul.f32 %v1420, 0.01
        %v1461 = vmul.f32 %v1425, 0.01
        %v1462 = vmul.f32 %v1430, 0.01
        %v1463 = vmul.f32 %v1435, 0.01
        %v1464 = vmul.f32 %v1440, 0.01
        %v1465 = vmul.f32 %v1445, 0.01
        %v1466 = vmul.f32 %v1450, 0.01
        %v1467 = vmul.f32 %v1455, 0.01
        %v1468 = vmax.f32 %v1410, %v1458
        %v1469 = vmax.f32 %v1415, %v1459
        %v1470 = vmax.f32 %v1420, %v1460
        %v1471 = vmax.f32 %v1425, %v1461
        %v1472 = vmax.f32 %v1430, %v1462
        %v1473 = vmax.f32 %v1435, %v1463
        %v1474 = vmax.f32 %v1440, %v1464
        %v1475 = vmax.f32 %v1445, %v1465
        %v1476 = vmax.f32 %v1450, %v1466
        %v1477 = vmax.f32 %v1455, %v1467
        %v1478 = vld [vmem:[%s7] sm:$0xff]
        %v1479 = vld [vmem:[%s7 + $0x8] sm:$0xff]
        %v1480 = vld [vmem:[%s7 + $0x10] sm:$0xff]
        %v1481 = vld [vmem:[%s7 + $0x18] sm:$0xff]
        %v1482 = vld [vmem:[%s7 + $0x20] sm:$0xff]
        %v1483 = vld [vmem:[%s8] sm:$0xff]
        %v1484 = vld [vmem:[%s8 + $0x8] sm:$0xff]
        %v1485 = vld [vmem:[%s8 + $0x10] sm:$0xff]
        %v1486 = vld [vmem:[%s8 + $0x18] sm:$0xff]
        %v1487 = vld [vmem:[%s8 + $0x20] sm:$0xff]
        %1489 = vset.pattern.permute.xlu0 0
        %1490 = vperm.xlu0 %1489, %v1483
        %v1491 = vpop.permute.xlu0 %1490
        %1494 = vset.pattern.permute.xlu0 0
        %1495 = vperm.xlu0 %1494, %v1484
        %v1496 = vpop.permute.xlu0 %1495
        %1499 = vset.pattern.permute.xlu0 0
        %1500 = vperm.xlu0 %1499, %v1485
        %v1501 = vpop.permute.xlu0 %1500
        %1504 = vset.pattern.permute.xlu0 0
        %1505 = vperm.xlu0 %1504, %v1486
        %v1506 = vpop.permute.xlu0 %1505
        %1509 = vset.pattern.permute.xlu0 0
        %1510 = vperm.xlu0 %1509, %v1487
        %v1511 = vpop.permute.xlu0 %1510
        %vm1513 = vcmask 654336
        %v1515 = vsel %vm1513, %v1478, 0
        %v1518 = vsel %vm1513, %v1479, 0
        %v1521 = vsel %vm1513, %v1480, 0
        %v1524 = vsel %vm1513, %v1481, 0
        %v1527 = vsel %vm1513, %v1482, 0
        %1529 = vmatprep.subr.mxu0 0.0
        %1530 = vmatpush1.msra.mxu0 0.0
        %1531 = vmatprep.subr.mxu0 0.0
        %1532 = vmatpush1.msra.mxu0 0.0
        %1533 = vmatprep.subr.mxu0 0.0
        %1534 = vmatpush1.msra.mxu0 0.0
        %1535 = vmatprep.subr.mxu0 0.0
        %1536 = vmatpush1.msra.mxu0 0.0
        %1537 = vmatprep.subr.mxu0 0.0
        %1538 = vmatpush1.msra.mxu0 0.0
        %1539 = vmatprep.subr.mxu0 0.0
        %1540 = vmatpush1.msra.mxu0 0.0
        %1541 = vmatprep.subr.mxu0 0.0
        %1542 = vmatpush1.msra.mxu0 %v1477
        %1543 = vmatprep.subr.mxu0 0.0
        %1544 = vmatpush1.msra.mxu0 %v1476
        %1545 = vmatprep.subr.mxu0 0.0
        %1546 = vmatpush1.msra.mxu0 %v1475
        %1547 = vmatprep.subr.mxu0 0.0
        %1548 = vmatpush1.msra.mxu0 %v1474
        %1549 = vmatprep.subr.mxu0 0.0
        %1550 = vmatpush1.msra.mxu0 %v1473
        %1551 = vmatprep.subr.mxu0 0.0
        %1552 = vmatpush1.msra.mxu0 %v1472
        %1553 = vmatprep.subr.mxu0 0.0
        %1554 = vmatpush1.msra.mxu0 %v1471
        %1555 = vmatprep.subr.mxu0 0.0
        %1556 = vmatpush1.msra.mxu0 %v1470
        %1557 = vmatprep.subr.mxu0 0.0
        %1558 = vmatpush1.msra.mxu0 %v1469
        %1559 = vmatprep.subr.mxu0 0.0
        %1560 = vmatpush1.msra.mxu0 %v1468
        %1561 = vmatprep.subr.mxu0 0.0
        %1562 = vmatpush2.msra.mxu0 0.0
        %1563 = vmatprep.subr.mxu0 0.0
        %1564 = vmatpush2.msra.mxu0 0.0
        %1565 = vmatprep.subr.mxu0 0.0
        %1566 = vmatpush2.msra.mxu0 0.0
        %1567 = vmatprep.subr.mxu0 0.0
        %1568 = vmatpush2.msra.mxu0 0.0
        %1569 = vmatprep.subr.mxu0 0.0
        %1570 = vmatpush2.msra.mxu0 0.0
        %1571 = vmatprep.subr.mxu0 0.0
        %1572 = vmatpush2.msra.mxu0 0.0
        %1573 = vmatprep.subr.mxu0 0.0
        %1574 = vmatpush2.msra.mxu0 0.0
        %1575 = vmatprep.subr.mxu0 0.0
        %1576 = vmatpush2.msra.mxu0 0.0
        %1577 = vmatprep.subr.mxu0 0.0
        %1578 = vmatpush2.msra.mxu0 0.0
        %1579 = vmatprep.subr.mxu0 0.0
        %1580 = vmatpush2.msra.mxu0 0.0
        %1581 = vmatprep.subr.mxu0 0.0
        %1582 = vmatpush2.msra.mxu0 0.0
        %1583 = vmatprep.subr.mxu0 0.0
        %1584 = vmatpush2.msra.mxu0 0.0
        %1585 = vmatprep.subr.mxu0 0.0
        %1586 = vmatpush2.msra.mxu0 0.0
        %1587 = vmatprep.subr.mxu0 0.0
        %1588 = vmatpush2.msra.mxu0 0.0
        %1589 = vmatprep.subr.mxu0 0.0
        %1590 = vmatpush2.msra.mxu0 0.0
        %1591 = vmatprep.subr.mxu0 0.0
        %1592 = vmatpush2.msra.mxu0 0.0
        %1593 = vmatprep.mubr.f32.mxu0 0.0
        %1594 = vmatmul.mubr.f32.gmra.mxu0 %v1515
        %v1595 = vpop.f32.mrf.mxu0
        %v1596 = vadd.f32 %v1491, %v1595
        %v1597 = vpop.f32.mrf.mxu0
        %1598 = vmatprep.mubr.f32.mxu0 0.0
        %1599 = vmatmul.mubr.f32.gmra.mxu0 %v1518
        %v1600 = vpop.f32.mrf.mxu0
        %v1601 = vadd.f32 %v1496, %v1600
        %v1602 = vpop.f32.mrf.mxu0
        %1603 = vmatprep.mubr.f32.mxu0 0.0
        %1604 = vmatmul.mubr.f32.gmra.mxu0 %v1521
        %v1605 = vpop.f32.mrf.mxu0
        %v1606 = vadd.f32 %v1501, %v1605
        %v1607 = vpop.f32.mrf.mxu0
        %1608 = vmatprep.mubr.f32.mxu0 0.0
        %1609 = vmatmul.mubr.f32.gmra.mxu0 %v1524
        %v1610 = vpop.f32.mrf.mxu0
        %v1611 = vadd.f32 %v1506, %v1610
        %v1612 = vpop.f32.mrf.mxu0
        %1613 = vmatprep.mubr.f32.mxu0 0.0
        %1614 = vmatmul.mubr.f32.gmra.mxu0 %v1527
        %v1615 = vpop.f32.mrf.mxu0
        %v1616 = vadd.f32 %v1511, %v1615
        %v1617 = vpop.f32.mrf.mxu0
        %1618 = vdwg.mxu0
        %v1619 = vmul.f32 %v1596, 0.01
        %v1620 = vmul.f32 %v1601, 0.01
        %v1621 = vmul.f32 %v1606, 0.01
        %v1622 = vmul.f32 %v1611, 0.01
        %v1623 = vmul.f32 %v1616, 0.01
        %v1624 = vmax.f32 %v1596, %v1619
        %v1625 = vmax.f32 %v1601, %v1620
        %v1626 = vmax.f32 %v1606, %v1621
        %v1627 = vmax.f32 %v1611, %v1622
        %v1628 = vmax.f32 %v1616, %v1623
        %v1629 = vld [vmem:[%s9] sm:$0xff]
        %v1630 = vld [vmem:[%s9 + $0x8] sm:$0xff]
        %v1631 = vld [vmem:[%s9 + $0x10] sm:$0xff]
        %v1632 = vld [vmem:[%s9 + $0x18] sm:$0xff]
        %v1633 = vld [vmem:[%s9 + $0x20] sm:$0xff]
        %1635 = vset.pattern.permute.xlu0 0
        %1636 = vperm.xlu0 %1635, %v1629
        %v1637 = vpop.permute.xlu0 %1636
        %1640 = vset.pattern.permute.xlu0 0
        %1641 = vperm.xlu0 %1640, %v1630
        %v1642 = vpop.permute.xlu0 %1641
        %1645 = vset.pattern.permute.xlu0 0
        %1646 = vperm.xlu0 %1645, %v1631
        %v1647 = vpop.permute.xlu0 %1646
        %1650 = vset.pattern.permute.xlu0 0
        %1651 = vperm.xlu0 %1650, %v1632
        %v1652 = vpop.permute.xlu0 %1651
        %1655 = vset.pattern.permute.xlu0 0
        %1656 = vperm.xlu0 %1655, %v1633
        %v1657 = vpop.permute.xlu0 %1656
        %v1659 = vmul.f32 %v1637, %v1624
        %v1660 = vmul.f32 %v1642, %v1625
        %v1661 = vmul.f32 %v1647, %v1626
        %v1662 = vmul.f32 %v1652, %v1627
        %v1663 = vmul.f32 %v1657, %v1628
        %v1664 = vadd.f32 %v1659, %v1660
        %v1665 = vadd.f32 %v1664, %v1661
        %v1666 = vadd.f32 %v1665, %v1662
        %v1667 = vadd.f32 %v1666, %v1663
        %v1668 = vrot.slane %v1667, 4
        %v1669 = vadd.f32 %v1667, %v1668
        %v1670 = vrot.slane %v1669, 2
        %v1671 = vadd.f32 %v1669, %v1670
        %v1672 = vrot.slane %v1671, 1
        %v1673 = vadd.f32 %v1671, %v1672
        %1674 = vst [vmem:[%s394] sm:$0x1] %v1673
        %p1675 = scmp.lt.s32.totalorder %s21, 2
        %s1676 = scalar_select %p1675, %s21, 2
        %s1677 = scalar_lea.vmem %s10, %s1676
        // Predicated region
        $region99: #{network_forward.1} parent=93 // pred_check
          %p1678 = pneg %p254
        $region100: #{network_forward.1} parent=93 // pred_check_branch
          %1680 = sbr.rel (%p1678) target = $region102
        $region101: #{network_forward.1} parent=93 // pred_region
          _
        $region102: #{network_forward.1} parent=93 // pred_fallthru
          _
      $region94: #{network_forward.1} parent=5 // pred_fallthru
        _
      %p1681 = scmp.le.s32.totalorder 2, %s16
      // Predicated region
      $region103: #{network_forward.1} parent=5 // pred_check
        %p1682 = pneg %p1681
      $region104: #{network_forward.1} parent=5 // pred_check_branch
        %1684 = sbr.rel (%p1682) target = $region106
      $region105: #{network_forward.1} parent=5 // pred_region
        %s1685 = ssub.s32 %s16, 2
        // Predicated region
        $region107: #{network_forward.1} parent=105 // pred_check
          %p1686 = pneg %p260
        $region108: #{network_forward.1} parent=105 // pred_check_branch
          %1688 = sbr.rel (%p1686) target = $region110
        $region109: #{network_forward.1} parent=105 // pred_region
          %p1689 = scmp.lt.s32.totalorder %s22, 2
          %s1690 = scalar_select %p1689, %s22, 2
          %s1691 = scalar_lea.vmem %s10, %s1690
        $region110: #{network_forward.1} parent=105 // pred_fallthru
          _
      $region106: #{network_forward.1} parent=5 // pred_fallthru
        _
    $region6: #{network_forward.1} parent=1 // loop_footer
      %s20 = sadd.s32 1, %s16
    $region7: #{network_forward.1} parent=1 // loop_footer_branch
      %15 = sbr.rel target = $region3
    $region8: #{network_forward.1} parent=1 // loop_exit
      _

</llo_original>
